<compile_context>
chip_gen: v7x
topology: tpu7x:2x2x1
jax: 0.10.0
libtpu: 0.0.40
codegen_flags: <defaults>
</compile_context>

<pallas_src>
import jax
import jax.numpy as jnp
import numpy as np
from jax.experimental import pallas as pl
from jax.experimental.pallas import tpu as pltpu


def lstm_kernel(x_ref, wih_ref, whh_ref, b_ref, wlin_ref, blin_ref,
                h0_ref, c0_ref,
                out_ref, hT_ref, cT_ref,
                xg_ref, hseq_ref):
    """Single-invocation kernel: full-sequence LSTM + linear + log_softmax.

    x_ref    : (S, E)   embedded inputs
    wih_ref  : (E, 4H)  input->gates weight (pre-transposed)
    whh_ref  : (H, 4H)  hidden->gates weight (pre-transposed)
    b_ref    : (1, 4H)  b_ih + b_hh
    wlin_ref : (H, V)   output projection weight (pre-transposed)
    blin_ref : (1, V)   output projection bias
    h0_ref   : (1, H)   initial hidden state
    c0_ref   : (1, H)   initial cell state
    out_ref  : (S, V)   log-softmax outputs
    hT_ref   : (1, H)   final hidden state
    cT_ref   : (1, H)   final cell state
    xg_ref   : (S, 4H)  VMEM scratch, precomputed input-gate contributions
    hseq_ref : (S, H)   VMEM scratch, per-timestep hidden states
    """
    S = x_ref.shape[0]
    H = h0_ref.shape[-1]

    whh = whh_ref[...]  # hoisted: read recurrent weights once

    # --- Hoisted: all input->gate contributions in ONE batched MXU matmul. ---
    xg_ref[...] = (jnp.dot(x_ref[...], wih_ref[...],
                           preferred_element_type=jnp.float32)
                   + b_ref[...])                                   # (S, 4H)

    # --- Sequential recurrence: only h @ W_hh + gate math per step. ---
    # NOTE: at H=32 the i/f/g/o lane slices of the (1, 4H) gate vreg are minor;
    # for H >= 128 a gate-major (4, H) layout would avoid the lane slicing.
    def step(t, carry):
        h, c = carry                                               # (1, H) each
        gates = (xg_ref[pl.ds(t, 1), :]
                 + jnp.dot(h, whh, preferred_element_type=jnp.float32))  # (1, 4H)
        # PyTorch gate order: i, f, g, o.  One EUP sigmoid pass over the whole
        # gate vreg, then static lane slices (3x fewer transcendental passes
        # than per-gate sigmoid on 32-lane slices).
        sig = jax.nn.sigmoid(gates)
        i = sig[:, 0 * H:1 * H]
        f = sig[:, 1 * H:2 * H]
        o = sig[:, 3 * H:4 * H]
        g = jnp.tanh(gates[:, 2 * H:3 * H])
        c_new = f * c + i * g
        h_new = o * jnp.tanh(c_new)
        hseq_ref[pl.ds(t, 1), :] = h_new
        return h_new, c_new

    # S is small & static -> fully unroll for LLO scheduler visibility.
    hT, cT = jax.lax.fori_loop(0, S, step, (h0_ref[...], c0_ref[...]),
                               unroll=True)
    hT_ref[...] = hT
    cT_ref[...] = cT

    # --- Batched projection + log_softmax after the loop. ---
    # TODO(synk): for real vocab sizes (V ~ 32k+) tile this projection over V
    # (separate pallas_call with a "parallel" grid axis) instead of whole-array
    # VMEM blocks, and consider bf16 inputs with f32 accumulation on v6e/v7x.
    logits = (jnp.dot(hseq_ref[...], wlin_ref[...],
                      preferred_element_type=jnp.float32)
              + blin_ref[...])                                     # (S, V)
    m = jnp.max(logits, axis=-1, keepdims=True)
    lse = jnp.log(jnp.sum(jnp.exp(logits - m), axis=-1, keepdims=True)) + m
    out_ref[...] = logits - lse                                    # one dense store


def lstm_forward(tokens, params, hidden):
    """Matches LSTM.forward(input, hidden) from the PyTorch module (eval mode)."""
    emb_table, w_ih, w_hh, b_ih, b_hh, w_lin, b_lin = params
    h0, c0 = hidden                                    # each (1, 1, H)

    S = tokens.shape[0]
    H = w_hh.shape[1]
    V = w_lin.shape[0]

    # Glue: embedding lookup + weight pre-transposition (XLA handles the gather).
    embeds = jnp.take(emb_table, tokens, axis=0)       # (S, E)
    wih_t = w_ih.T                                     # (E, 4H)
    whh_t = w_hh.T                                     # (H, 4H)
    b = (b_ih + b_hh)[None, :]                         # (1, 4H)
    wlin_t = w_lin.T                                   # (H, V)
    blin = b_lin[None, :]                              # (1, V)
    h0_2d = h0.reshape(1, H)
    c0_2d = c0.reshape(1, H)

    vmem = pl.BlockSpec(memory_space=pltpu.MemorySpace.VMEM)
    out, hT, cT = pl.pallas_call(
        lstm_kernel,
        out_shape=(
            jax.ShapeDtypeStruct((S, V), jnp.float32),
            jax.ShapeDtypeStruct((1, H), jnp.float32),
            jax.ShapeDtypeStruct((1, H), jnp.float32),
        ),
        in_specs=[vmem] * 8,
        out_specs=(vmem, vmem, vmem),
        scratch_shapes=[
            pltpu.VMEM((S, 4 * H), jnp.float32),   # xg: precomputed input gates
            pltpu.VMEM((S, H), jnp.float32),       # hseq: per-step hidden states
        ],
    )(embeds, wih_t, whh_t, b, wlin_t, blin, h0_2d, c0_2d)

    # Dropout(p=0.1) in eval mode is identity.
    # TODO(synk): training-mode dropout (stochastic mask via pltpu.prng_*) not implemented.
    return out, (hT.reshape(1, 1, H), cT.reshape(1, 1, H))


def init_params(key, input_dim, embed_dim, hidden_dim):
    """Deterministic parameter init mirroring PyTorch module shapes."""
    k = jax.random.split(key, 7)
    s = 1.0 / np.sqrt(hidden_dim)
    emb_table = jax.random.normal(k[0], (input_dim, embed_dim), jnp.float32)
    w_ih = jax.random.uniform(k[1], (4 * hidden_dim, embed_dim), jnp.float32, -s, s)
    w_hh = jax.random.uniform(k[2], (4 * hidden_dim, hidden_dim), jnp.float32, -s, s)
    b_ih = jax.random.uniform(k[3], (4 * hidden_dim,), jnp.float32, -s, s)
    b_hh = jax.random.uniform(k[4], (4 * hidden_dim,), jnp.float32, -s, s)
    w_lin = jax.random.uniform(k[5], (input_dim, hidden_dim), jnp.float32, -s, s)
    b_lin = jax.random.uniform(k[6], (input_dim,), jnp.float32, -s, s)
    return emb_table, w_ih, w_hh, b_ih, b_hh, w_lin, b_lin


def lstm_forward_ref(tokens, params, hidden):
    """Pure-JAX reference for correctness checking."""
    emb_table, w_ih, w_hh, b_ih, b_hh, w_lin, b_lin = params
    h, c = hidden[0].reshape(1, -1), hidden[1].reshape(1, -1)
    H = h.shape[-1]
    embeds = jnp.take(emb_table, tokens, axis=0)
    outs = []
    for t in range(tokens.shape[0]):
        x_t = embeds[t][None, :]
        gates = x_t @ w_ih.T + h @ w_hh.T + b_ih + b_hh
        i = jax.nn.sigmoid(gates[:, 0 * H:1 * H])
        f = jax.nn.sigmoid(gates[:, 1 * H:2 * H])
        g = jnp.tanh(gates[:, 2 * H:3 * H])
        o = jax.nn.sigmoid(gates[:, 3 * H:4 * H])
        c = f * c + i * g
        h = o * jnp.tanh(c)
        logits = h @ w_lin.T + b_lin
        outs.append(jax.nn.log_softmax(logits, axis=-1))
    out = jnp.concatenate(outs, axis=0)
    return out, (h.reshape(1, 1, H), c.reshape(1, 1, H))


if __name__ == "__main__":
    input_dim = 16    # vocab size
    embed_dim = 8
    hidden_dim = 32
    seq_len = 8

    key = jax.random.PRNGKey(0)
    pkey, tkey = jax.random.split(key)
    params = init_params(pkey, input_dim, embed_dim, hidden_dim)
    tokens = jax.random.randint(tkey, (seq_len,), 0, input_dim, jnp.int32)
    hidden = (jnp.zeros((1, 1, hidden_dim), jnp.float32),
              jnp.zeros((1, 1, hidden_dim), jnp.float32))

    out, (hT, cT) = lstm_forward(tokens, params, hidden)
    jax.block_until_ready(out)
    jax.block_until_ready(hT)
    jax.block_until_ready(cT)

    out_r, (hT_r, cT_r) = lstm_forward_ref(tokens, params, hidden)
    assert out.shape == (seq_len, input_dim)
    assert hT.shape == (1, 1, hidden_dim) and cT.shape == (1, 1, hidden_dim)
    np.testing.assert_allclose(np.asarray(out), np.asarray(out_r), rtol=1e-4, atol=1e-5)
    np.testing.assert_allclose(np.asarray(hT), np.asarray(hT_r), rtol=1e-4, atol=1e-5)
    np.testing.assert_allclose(np.asarray(cT), np.asarray(cT_r), rtol=1e-4, atol=1e-5)

    print("KERNEL_OK")
</pallas_src>

<mosaic_0001>
module attributes {stable_mosaic.version = 11 : i64} {
  func.func @lstm_kernel(%arg0: memref<8x8xf32, #tpu.memory_space<vmem>>, %arg1: memref<8x128xf32, #tpu.memory_space<vmem>>, %arg2: memref<32x128xf32, #tpu.memory_space<vmem>>, %arg3: memref<1x128xf32, #tpu.memory_space<vmem>>, %arg4: memref<32x16xf32, #tpu.memory_space<vmem>>, %arg5: memref<1x16xf32, #tpu.memory_space<vmem>>, %arg6: memref<1x32xf32, #tpu.memory_space<vmem>>, %arg7: memref<1x32xf32, #tpu.memory_space<vmem>>, %arg8: memref<8x16xf32, #tpu.memory_space<vmem>>, %arg9: memref<1x32xf32, #tpu.memory_space<vmem>>, %arg10: memref<1x32xf32, #tpu.memory_space<vmem>>, %arg11: memref<8x128xf32, #tpu.memory_space<vmem>>, %arg12: memref<8x32xf32, #tpu.memory_space<vmem>>) attributes {dimension_semantics = [], scalar_prefetch = 0 : i64, scratch_operands = 2 : i64, tpu.core_type = #tpu.core_type<tc>} {
    %c0 = arith.constant 0 : index
    %c0_0 = arith.constant 0 : index
    %0 = vector.load %arg2[%c0, %c0_0] : memref<32x128xf32, #tpu.memory_space<vmem>>, vector<32x128xf32>
    %c0_1 = arith.constant 0 : index
    %c0_2 = arith.constant 0 : index
    %1 = vector.load %arg0[%c0_1, %c0_2] : memref<8x8xf32, #tpu.memory_space<vmem>>, vector<8x8xf32>
    %c0_3 = arith.constant 0 : index
    %c0_4 = arith.constant 0 : index
    %2 = vector.load %arg1[%c0_3, %c0_4] : memref<8x128xf32, #tpu.memory_space<vmem>>, vector<8x128xf32>
    %cst = arith.constant dense<0.000000e+00> : vector<8x128xf32>
    %3 = tpu.matmul %1, %2, %cst {dimension_numbers = #tpu.dot_dimension_numbers<[1], [0], [0], [1], [0, 0, 1, 1], [], []>} : vector<8x8xf32>, vector<8x128xf32>, vector<8x128xf32> -> vector<8x128xf32>
    %c0_5 = arith.constant 0 : index
    %c0_6 = arith.constant 0 : index
    %4 = vector.load %arg3[%c0_5, %c0_6] : memref<1x128xf32, #tpu.memory_space<vmem>>, vector<1x128xf32>
    %5 = vector.broadcast %4 : vector<1x128xf32> to vector<8x128xf32>
    %6 = arith.addf %3, %5 : vector<8x128xf32>
    %c0_7 = arith.constant 0 : index
    %c0_8 = arith.constant 0 : index
    %7 = vector.load %arg11[%c0_7, %c0_8] : memref<8x128xf32, #tpu.memory_space<vmem>>, vector<8x128xf32>
    tpu.vector_store %arg11[%c0_7, %c0_8], %6 {strides = array<i32>} : memref<8x128xf32, #tpu.memory_space<vmem>>, vector<8x128xf32>,
    %c0_9 = arith.constant 0 : index
    %c0_10 = arith.constant 0 : index
    %8 = vector.load %arg6[%c0_9, %c0_10] : memref<1x32xf32, #tpu.memory_space<vmem>>, vector<1x32xf32>
    %c0_11 = arith.constant 0 : index
    %c0_12 = arith.constant 0 : index
    %9 = vector.load %arg7[%c0_11, %c0_12] : memref<1x32xf32, #tpu.memory_space<vmem>>, vector<1x32xf32>
    %c0_i32 = arith.constant 0 : i32
    %10 = arith.index_cast %c0_i32 : i32 to index
    %c0_13 = arith.constant 0 : index
    %11 = vector.load %arg11[%10, %c0_13] : memref<8x128xf32, #tpu.memory_space<vmem>>, vector<1x128xf32>
    %cst_14 = arith.constant dense<0.000000e+00> : vector<1x128xf32>
    %12 = tpu.matmul %8, %0, %cst_14 {dimension_numbers = #tpu.dot_dimension_numbers<[1], [0], [0], [1], [0, 0, 1, 1], [], []>} : vector<1x32xf32>, vector<32x128xf32>, vector<1x128xf32> -> vector<1x128xf32>
    %13 = arith.addf %11, %12 : vector<1x128xf32>
    %14 = arith.negf %13 : vector<1x128xf32>
    %15 = math.exp %14 : vector<1x128xf32>
    %cst_15 = arith.constant 1.000000e+00 : f32
    %16 = vector.broadcast %cst_15 : f32 to vector<1x128xf32>
    %17 = arith.addf %16, %15 : vector<1x128xf32>
    %18 = arith.divf %16, %17 : vector<1x128xf32>
    %19 = vector.extract_strided_slice %18 {offsets = [0, 0], sizes = [1, 32], strides = [1, 1]} : vector<1x128xf32> to vector<1x32xf32>
    %20 = vector.extract_strided_slice %18 {offsets = [0, 32], sizes = [1, 32], strides = [1, 1]} : vector<1x128xf32> to vector<1x32xf32>
    %21 = vector.extract_strided_slice %18 {offsets = [0, 96], sizes = [1, 32], strides = [1, 1]} : vector<1x128xf32> to vector<1x32xf32>
    %22 = vector.extract_strided_slice %13 {offsets = [0, 64], sizes = [1, 32], strides = [1, 1]} : vector<1x128xf32> to vector<1x32xf32>
    %23 = math.tanh %22 : vector<1x32xf32>
    %24 = arith.mulf %20, %9 : vector<1x32xf32>
    %25 = arith.mulf %19, %23 : vector<1x32xf32>
    %26 = arith.addf %24, %25 : vector<1x32xf32>
    %27 = math.tanh %26 : vector<1x32xf32>
    %28 = arith.mulf %21, %27 : vector<1x32xf32>
    %29 = arith.index_cast %c0_i32 : i32 to index
    %c0_16 = arith.constant 0 : index
    %30 = vector.load %arg12[%29, %c0_16] : memref<8x32xf32, #tpu.memory_space<vmem>>, vector<1x32xf32>
    tpu.vector_store %arg12[%29, %c0_16], %28 {strides = array<i32>} : memref<8x32xf32, #tpu.memory_space<vmem>>, vector<1x32xf32>,
    %c1_i32 = arith.constant 1 : i32
    %31 = arith.index_cast %c1_i32 : i32 to index
    %c0_17 = arith.constant 0 : index
    %32 = vector.load %arg11[%31, %c0_17] : memref<8x128xf32, #tpu.memory_space<vmem>>, vector<1x128xf32>
    %cst_18 = arith.constant dense<0.000000e+00> : vector<1x128xf32>
    %33 = tpu.matmul %28, %0, %cst_18 {dimension_numbers = #tpu.dot_dimension_numbers<[1], [0], [0], [1], [0, 0, 1, 1], [], []>} : vector<1x32xf32>, vector<32x128xf32>, vector<1x128xf32> -> vector<1x128xf32>
    %34 = arith.addf %32, %33 : vector<1x128xf32>
    %35 = arith.negf %34 : vector<1x128xf32>
    %36 = math.exp %35 : vector<1x128xf32>
    %cst_19 = arith.constant 1.000000e+00 : f32
    %37 = vector.broadcast %cst_19 : f32 to vector<1x128xf32>
    %38 = arith.addf %37, %36 : vector<1x128xf32>
    %39 = arith.divf %37, %38 : vector<1x128xf32>
    %40 = vector.extract_strided_slice %39 {offsets = [0, 0], sizes = [1, 32], strides = [1, 1]} : vector<1x128xf32> to vector<1x32xf32>
    %41 = vector.extract_strided_slice %39 {offsets = [0, 32], sizes = [1, 32], strides = [1, 1]} : vector<1x128xf32> to vector<1x32xf32>
    %42 = vector.extract_strided_slice %39 {offsets = [0, 96], sizes = [1, 32], strides = [1, 1]} : vector<1x128xf32> to vector<1x32xf32>
    %43 = vector.extract_strided_slice %34 {offsets = [0, 64], sizes = [1, 32], strides = [1, 1]} : vector<1x128xf32> to vector<1x32xf32>
    %44 = math.tanh %43 : vector<1x32xf32>
    %45 = arith.mulf %41, %26 : vector<1x32xf32>
    %46 = arith.mulf %40, %44 : vector<1x32xf32>
    %47 = arith.addf %45, %46 : vector<1x32xf32>
    %48 = math.tanh %47 : vector<1x32xf32>
    %49 = arith.mulf %42, %48 : vector<1x32xf32>
    %50 = arith.index_cast %c1_i32 : i32 to index
    %c0_20 = arith.constant 0 : index
    %51 = vector.load %arg12[%50, %c0_20] : memref<8x32xf32, #tpu.memory_space<vmem>>, vector<1x32xf32>
    tpu.vector_store %arg12[%50, %c0_20], %49 {strides = array<i32>} : memref<8x32xf32, #tpu.memory_space<vmem>>, vector<1x32xf32>,
    %c2_i32 = arith.constant 2 : i32
    %52 = arith.index_cast %c2_i32 : i32 to index
    %c0_21 = arith.constant 0 : index
    %53 = vector.load %arg11[%52, %c0_21] : memref<8x128xf32, #tpu.memory_space<vmem>>, vector<1x128xf32>
    %cst_22 = arith.constant dense<0.000000e+00> : vector<1x128xf32>
    %54 = tpu.matmul %49, %0, %cst_22 {dimension_numbers = #tpu.dot_dimension_numbers<[1], [0], [0], [1], [0, 0, 1, 1], [], []>} : vector<1x32xf32>, vector<32x128xf32>, vector<1x128xf32> -> vector<1x128xf32>
    %55 = arith.addf %53, %54 : vector<1x128xf32>
    %56 = arith.negf %55 : vector<1x128xf32>
    %57 = math.exp %56 : vector<1x128xf32>
    %cst_23 = arith.constant 1.000000e+00 : f32
    %58 = vector.broadcast %cst_23 : f32 to vector<1x128xf32>
    %59 = arith.addf %58, %57 : vector<1x128xf32>
    %60 = arith.divf %58, %59 : vector<1x128xf32>
    %61 = vector.extract_strided_slice %60 {offsets = [0, 0], sizes = [1, 32], strides = [1, 1]} : vector<1x128xf32> to vector<1x32xf32>
    %62 = vector.extract_strided_slice %60 {offsets = [0, 32], sizes = [1, 32], strides = [1, 1]} : vector<1x128xf32> to vector<1x32xf32>
    %63 = vector.extract_strided_slice %60 {offsets = [0, 96], sizes = [1, 32], strides = [1, 1]} : vector<1x128xf32> to vector<1x32xf32>
    %64 = vector.extract_strided_slice %55 {offsets = [0, 64], sizes = [1, 32], strides = [1, 1]} : vector<1x128xf32> to vector<1x32xf32>
    %65 = math.tanh %64 : vector<1x32xf32>
    %66 = arith.mulf %62, %47 : vector<1x32xf32>
    %67 = arith.mulf %61, %65 : vector<1x32xf32>
    %68 = arith.addf %66, %67 : vector<1x32xf32>
    %69 = math.tanh %68 : vector<1x32xf32>
    %70 = arith.mulf %63, %69 : vector<1x32xf32>
    %71 = arith.index_cast %c2_i32 : i32 to index
    %c0_24 = arith.constant 0 : index
    %72 = vector.load %arg12[%71, %c0_24] : memref<8x32xf32, #tpu.memory_space<vmem>>, vector<1x32xf32>
    tpu.vector_store %arg12[%71, %c0_24], %70 {strides = array<i32>} : memref<8x32xf32, #tpu.memory_space<vmem>>, vector<1x32xf32>,
    %c3_i32 = arith.constant 3 : i32
    %73 = arith.index_cast %c3_i32 : i32 to index
    %c0_25 = arith.constant 0 : index
    %74 = vector.load %arg11[%73, %c0_25] : memref<8x128xf32, #tpu.memory_space<vmem>>, vector<1x128xf32>
    %cst_26 = arith.constant dense<0.000000e+00> : vector<1x128xf32>
    %75 = tpu.matmul %70, %0, %cst_26 {dimension_numbers = #tpu.dot_dimension_numbers<[1], [0], [0], [1], [0, 0, 1, 1], [], []>} : vector<1x32xf32>, vector<32x128xf32>, vector<1x128xf32> -> vector<1x128xf32>
    %76 = arith.addf %74, %75 : vector<1x128xf32>
    %77 = arith.negf %76 : vector<1x128xf32>
    %78 = math.exp %77 : vector<1x128xf32>
    %cst_27 = arith.constant 1.000000e+00 : f32
    %79 = vector.broadcast %cst_27 : f32 to vector<1x128xf32>
    %80 = arith.addf %79, %78 : vector<1x128xf32>
    %81 = arith.divf %79, %80 : vector<1x128xf32>
    %82 = vector.extract_strided_slice %81 {offsets = [0, 0], sizes = [1, 32], strides = [1, 1]} : vector<1x128xf32> to vector<1x32xf32>
    %83 = vector.extract_strided_slice %81 {offsets = [0, 32], sizes = [1, 32], strides = [1, 1]} : vector<1x128xf32> to vector<1x32xf32>
    %84 = vector.extract_strided_slice %81 {offsets = [0, 96], sizes = [1, 32], strides = [1, 1]} : vector<1x128xf32> to vector<1x32xf32>
    %85 = vector.extract_strided_slice %76 {offsets = [0, 64], sizes = [1, 32], strides = [1, 1]} : vector<1x128xf32> to vector<1x32xf32>
    %86 = math.tanh %85 : vector<1x32xf32>
    %87 = arith.mulf %83, %68 : vector<1x32xf32>
    %88 = arith.mulf %82, %86 : vector<1x32xf32>
    %89 = arith.addf %87, %88 : vector<1x32xf32>
    %90 = math.tanh %89 : vector<1x32xf32>
    %91 = arith.mulf %84, %90 : vector<1x32xf32>
    %92 = arith.index_cast %c3_i32 : i32 to index
    %c0_28 = arith.constant 0 : index
    %93 = vector.load %arg12[%92, %c0_28] : memref<8x32xf32, #tpu.memory_space<vmem>>, vector<1x32xf32>
    tpu.vector_store %arg12[%92, %c0_28], %91 {strides = array<i32>} : memref<8x32xf32, #tpu.memory_space<vmem>>, vector<1x32xf32>,
    %c4_i32 = arith.constant 4 : i32
    %94 = arith.index_cast %c4_i32 : i32 to index
    %c0_29 = arith.constant 0 : index
    %95 = vector.load %arg11[%94, %c0_29] : memref<8x128xf32, #tpu.memory_space<vmem>>, vector<1x128xf32>
    %cst_30 = arith.constant dense<0.000000e+00> : vector<1x128xf32>
    %96 = tpu.matmul %91, %0, %cst_30 {dimension_numbers = #tpu.dot_dimension_numbers<[1], [0], [0], [1], [0, 0, 1, 1], [], []>} : vector<1x32xf32>, vector<32x128xf32>, vector<1x128xf32> -> vector<1x128xf32>
    %97 = arith.addf %95, %96 : vector<1x128xf32>
    %98 = arith.negf %97 : vector<1x128xf32>
    %99 = math.exp %98 : vector<1x128xf32>
    %cst_31 = arith.constant 1.000000e+00 : f32
    %100 = vector.broadcast %cst_31 : f32 to vector<1x128xf32>
    %101 = arith.addf %100, %99 : vector<1x128xf32>
    %102 = arith.divf %100, %101 : vector<1x128xf32>
    %103 = vector.extract_strided_slice %102 {offsets = [0, 0], sizes = [1, 32], strides = [1, 1]} : vector<1x128xf32> to vector<1x32xf32>
    %104 = vector.extract_strided_slice %102 {offsets = [0, 32], sizes = [1, 32], strides = [1, 1]} : vector<1x128xf32> to vector<1x32xf32>
    %105 = vector.extract_strided_slice %102 {offsets = [0, 96], sizes = [1, 32], strides = [1, 1]} : vector<1x128xf32> to vector<1x32xf32>
    %106 = vector.extract_strided_slice %97 {offsets = [0, 64], sizes = [1, 32], strides = [1, 1]} : vector<1x128xf32> to vector<1x32xf32>
    %107 = math.tanh %106 : vector<1x32xf32>
    %108 = arith.mulf %104, %89 : vector<1x32xf32>
    %109 = arith.mulf %103, %107 : vector<1x32xf32>
    %110 = arith.addf %108, %109 : vector<1x32xf32>
    %111 = math.tanh %110 : vector<1x32xf32>
    %112 = arith.mulf %105, %111 : vector<1x32xf32>
    %113 = arith.index_cast %c4_i32 : i32 to index
    %c0_32 = arith.constant 0 : index
    %114 = vector.load %arg12[%113, %c0_32] : memref<8x32xf32, #tpu.memory_space<vmem>>, vector<1x32xf32>
    tpu.vector_store %arg12[%113, %c0_32], %112 {strides = array<i32>} : memref<8x32xf32, #tpu.memory_space<vmem>>, vector<1x32xf32>,
    %c5_i32 = arith.constant 5 : i32
    %115 = arith.index_cast %c5_i32 : i32 to index
    %c0_33 = arith.constant 0 : index
    %116 = vector.load %arg11[%115, %c0_33] : memref<8x128xf32, #tpu.memory_space<vmem>>, vector<1x128xf32>
    %cst_34 = arith.constant dense<0.000000e+00> : vector<1x128xf32>
    %117 = tpu.matmul %112, %0, %cst_34 {dimension_numbers = #tpu.dot_dimension_numbers<[1], [0], [0], [1], [0, 0, 1, 1], [], []>} : vector<1x32xf32>, vector<32x128xf32>, vector<1x128xf32> -> vector<1x128xf32>
    %118 = arith.addf %116, %117 : vector<1x128xf32>
    %119 = arith.negf %118 : vector<1x128xf32>
    %120 = math.exp %119 : vector<1x128xf32>
    %cst_35 = arith.constant 1.000000e+00 : f32
    %121 = vector.broadcast %cst_35 : f32 to vector<1x128xf32>
    %122 = arith.addf %121, %120 : vector<1x128xf32>
    %123 = arith.divf %121, %122 : vector<1x128xf32>
    %124 = vector.extract_strided_slice %123 {offsets = [0, 0], sizes = [1, 32], strides = [1, 1]} : vector<1x128xf32> to vector<1x32xf32>
    %125 = vector.extract_strided_slice %123 {offsets = [0, 32], sizes = [1, 32], strides = [1, 1]} : vector<1x128xf32> to vector<1x32xf32>
    %126 = vector.extract_strided_slice %123 {offsets = [0, 96], sizes = [1, 32], strides = [1, 1]} : vector<1x128xf32> to vector<1x32xf32>
    %127 = vector.extract_strided_slice %118 {offsets = [0, 64], sizes = [1, 32], strides = [1, 1]} : vector<1x128xf32> to vector<1x32xf32>
    %128 = math.tanh %127 : vector<1x32xf32>
    %129 = arith.mulf %125, %110 : vector<1x32xf32>
    %130 = arith.mulf %124, %128 : vector<1x32xf32>
    %131 = arith.addf %129, %130 : vector<1x32xf32>
    %132 = math.tanh %131 : vector<1x32xf32>
    %133 = arith.mulf %126, %132 : vector<1x32xf32>
    %134 = arith.index_cast %c5_i32 : i32 to index
    %c0_36 = arith.constant 0 : index
    %135 = vector.load %arg12[%134, %c0_36] : memref<8x32xf32, #tpu.memory_space<vmem>>, vector<1x32xf32>
    tpu.vector_store %arg12[%134, %c0_36], %133 {strides = array<i32>} : memref<8x32xf32, #tpu.memory_space<vmem>>, vector<1x32xf32>,
    %c6_i32 = arith.constant 6 : i32
    %136 = arith.index_cast %c6_i32 : i32 to index
    %c0_37 = arith.constant 0 : index
    %137 = vector.load %arg11[%136, %c0_37] : memref<8x128xf32, #tpu.memory_space<vmem>>, vector<1x128xf32>
    %cst_38 = arith.constant dense<0.000000e+00> : vector<1x128xf32>
    %138 = tpu.matmul %133, %0, %cst_38 {dimension_numbers = #tpu.dot_dimension_numbers<[1], [0], [0], [1], [0, 0, 1, 1], [], []>} : vector<1x32xf32>, vector<32x128xf32>, vector<1x128xf32> -> vector<1x128xf32>
    %139 = arith.addf %137, %138 : vector<1x128xf32>
    %140 = arith.negf %139 : vector<1x128xf32>
    %141 = math.exp %140 : vector<1x128xf32>
    %cst_39 = arith.constant 1.000000e+00 : f32
    %142 = vector.broadcast %cst_39 : f32 to vector<1x128xf32>
    %143 = arith.addf %142, %141 : vector<1x128xf32>
    %144 = arith.divf %142, %143 : vector<1x128xf32>
    %145 = vector.extract_strided_slice %144 {offsets = [0, 0], sizes = [1, 32], strides = [1, 1]} : vector<1x128xf32> to vector<1x32xf32>
    %146 = vector.extract_strided_slice %144 {offsets = [0, 32], sizes = [1, 32], strides = [1, 1]} : vector<1x128xf32> to vector<1x32xf32>
    %147 = vector.extract_strided_slice %144 {offsets = [0, 96], sizes = [1, 32], strides = [1, 1]} : vector<1x128xf32> to vector<1x32xf32>
    %148 = vector.extract_strided_slice %139 {offsets = [0, 64], sizes = [1, 32], strides = [1, 1]} : vector<1x128xf32> to vector<1x32xf32>
    %149 = math.tanh %148 : vector<1x32xf32>
    %150 = arith.mulf %146, %131 : vector<1x32xf32>
    %151 = arith.mulf %145, %149 : vector<1x32xf32>
    %152 = arith.addf %150, %151 : vector<1x32xf32>
    %153 = math.tanh %152 : vector<1x32xf32>
    %154 = arith.mulf %147, %153 : vector<1x32xf32>
    %155 = arith.index_cast %c6_i32 : i32 to index
    %c0_40 = arith.constant 0 : index
    %156 = vector.load %arg12[%155, %c0_40] : memref<8x32xf32, #tpu.memory_space<vmem>>, vector<1x32xf32>
    tpu.vector_store %arg12[%155, %c0_40], %154 {strides = array<i32>} : memref<8x32xf32, #tpu.memory_space<vmem>>, vector<1x32xf32>,
    %c7_i32 = arith.constant 7 : i32
    %157 = arith.index_cast %c7_i32 : i32 to index
    %c0_41 = arith.constant 0 : index
    %158 = vector.load %arg11[%157, %c0_41] : memref<8x128xf32, #tpu.memory_space<vmem>>, vector<1x128xf32>
    %cst_42 = arith.constant dense<0.000000e+00> : vector<1x128xf32>
    %159 = tpu.matmul %154, %0, %cst_42 {dimension_numbers = #tpu.dot_dimension_numbers<[1], [0], [0], [1], [0, 0, 1, 1], [], []>} : vector<1x32xf32>, vector<32x128xf32>, vector<1x128xf32> -> vector<1x128xf32>
    %160 = arith.addf %158, %159 : vector<1x128xf32>
    %161 = arith.negf %160 : vector<1x128xf32>
    %162 = math.exp %161 : vector<1x128xf32>
    %cst_43 = arith.constant 1.000000e+00 : f32
    %163 = vector.broadcast %cst_43 : f32 to vector<1x128xf32>
    %164 = arith.addf %163, %162 : vector<1x128xf32>
    %165 = arith.divf %163, %164 : vector<1x128xf32>
    %166 = vector.extract_strided_slice %165 {offsets = [0, 0], sizes = [1, 32], strides = [1, 1]} : vector<1x128xf32> to vector<1x32xf32>
    %167 = vector.extract_strided_slice %165 {offsets = [0, 32], sizes = [1, 32], strides = [1, 1]} : vector<1x128xf32> to vector<1x32xf32>
    %168 = vector.extract_strided_slice %165 {offsets = [0, 96], sizes = [1, 32], strides = [1, 1]} : vector<1x128xf32> to vector<1x32xf32>
    %169 = vector.extract_strided_slice %160 {offsets = [0, 64], sizes = [1, 32], strides = [1, 1]} : vector<1x128xf32> to vector<1x32xf32>
    %170 = math.tanh %169 : vector<1x32xf32>
    %171 = arith.mulf %167, %152 : vector<1x32xf32>
    %172 = arith.mulf %166, %170 : vector<1x32xf32>
    %173 = arith.addf %171, %172 : vector<1x32xf32>
    %174 = math.tanh %173 : vector<1x32xf32>
    %175 = arith.mulf %168, %174 : vector<1x32xf32>
    %176 = arith.index_cast %c7_i32 : i32 to index
    %c0_44 = arith.constant 0 : index
    %177 = vector.load %arg12[%176, %c0_44] : memref<8x32xf32, #tpu.memory_space<vmem>>, vector<1x32xf32>
    tpu.vector_store %arg12[%176, %c0_44], %175 {strides = array<i32>} : memref<8x32xf32, #tpu.memory_space<vmem>>, vector<1x32xf32>,
    %c8_i32 = arith.constant 8 : i32
    %c0_45 = arith.constant 0 : index
    %c0_46 = arith.constant 0 : index
    %178 = vector.load %arg9[%c0_45, %c0_46] : memref<1x32xf32, #tpu.memory_space<vmem>>, vector<1x32xf32>
    tpu.vector_store %arg9[%c0_45, %c0_46], %175 {strides = array<i32>} : memref<1x32xf32, #tpu.memory_space<vmem>>, vector<1x32xf32>,
    %c0_47 = arith.constant 0 : index
    %c0_48 = arith.constant 0 : index
    %179 = vector.load %arg10[%c0_47, %c0_48] : memref<1x32xf32, #tpu.memory_space<vmem>>, vector<1x32xf32>
    tpu.vector_store %arg10[%c0_47, %c0_48], %173 {strides = array<i32>} : memref<1x32xf32, #tpu.memory_space<vmem>>, vector<1x32xf32>,
    %c0_49 = arith.constant 0 : index
    %c0_50 = arith.constant 0 : index
    %180 = vector.load %arg12[%c0_49, %c0_50] : memref<8x32xf32, #tpu.memory_space<vmem>>, vector<8x32xf32>
    %c0_51 = arith.constant 0 : index
    %c0_52 = arith.constant 0 : index
    %181 = vector.load %arg4[%c0_51, %c0_52] : memref<32x16xf32, #tpu.memory_space<vmem>>, vector<32x16xf32>
    %cst_53 = arith.constant dense<0.000000e+00> : vector<8x16xf32>
    %182 = tpu.matmul %180, %181, %cst_53 {dimension_numbers = #tpu.dot_dimension_numbers<[1], [0], [0], [1], [0, 0, 1, 1], [], []>} : vector<8x32xf32>, vector<32x16xf32>, vector<8x16xf32> -> vector<8x16xf32>
    %c0_54 = arith.constant 0 : index
    %c0_55 = arith.constant 0 : index
    %183 = vector.load %arg5[%c0_54, %c0_55] : memref<1x16xf32, #tpu.memory_space<vmem>>, vector<1x16xf32>
    %184 = vector.broadcast %183 : vector<1x16xf32> to vector<8x16xf32>
    %185 = arith.addf %182, %184 : vector<8x16xf32>
    %cst_56 = arith.constant dense<0xFF800000> : vector<8xf32>
    %186 = vector.multi_reduction <maximumf>, %185, %cst_56 [1] : vector<8x16xf32> to vector<8xf32>
    %187 = vector.shape_cast %186 : vector<8xf32> to vector<8x1xf32>
    %188 = vector.broadcast %187 : vector<8x1xf32> to vector<8x16xf32>
    %189 = arith.subf %185, %188 : vector<8x16xf32>
    %190 = math.exp %189 : vector<8x16xf32>
    %cst_57 = arith.constant dense<0.000000e+00> : vector<8xf32>
    %191 = vector.multi_reduction <add>, %190, %cst_57 [1] : vector<8x16xf32> to vector<8xf32>
    %192 = vector.shape_cast %191 : vector<8xf32> to vector<8x1xf32>
    %193 = math.log %192 : vector<8x1xf32>
    %194 = arith.addf %193, %187 : vector<8x1xf32>
    %195 = vector.broadcast %194 : vector<8x1xf32> to vector<8x16xf32>
    %196 = arith.subf %185, %195 : vector<8x16xf32>
    %c0_58 = arith.constant 0 : index
    %c0_59 = arith.constant 0 : index
    %197 = vector.load %arg8[%c0_58, %c0_59] : memref<8x16xf32, #tpu.memory_space<vmem>>, vector<8x16xf32>
    tpu.vector_store %arg8[%c0_58, %c0_59], %196 {strides = array<i32>} : memref<8x16xf32, #tpu.memory_space<vmem>>, vector<8x16xf32>,
    return
  }
}

</mosaic_0001>

<llo_original>
// kernel: tpu_custom_call.1
$region0: #{tpu_custom_call.1}
  #allocation0 [shape = 'u32[]', space=smem, size = 0x4, offset = 0x4, fixed_abs, tag = 'smem constant byte address 0x4 - core index']
  #allocation1 [shape = 'u32[144,128]{1,0:T(1,128)}', space=vmem, size = 0x12000, scoped, tag = 'internal scratch']
  #allocation2 [shape = 'f32[8,128]{1,0:T(8,128)}', space=vmem, size = 0x1000, scoped, tag = 'scratch operand']
  #allocation3 [shape = 'f32[8,32]{1,0:T(8,128)}', space=vmem, size = 0x1000, scoped, tag = 'scratch operand']
  %s0 = inlined_call_operand.vmem [shape: f32[8,8], index: 0, kind: input, shape index: {}]
  %s1 = inlined_call_operand.vmem [shape: f32[8,128], index: 1, kind: input, shape index: {}]
  %s2 = inlined_call_operand.vmem [shape: f32[32,128], index: 2, kind: input, shape index: {}]
  %s3 = inlined_call_operand.vmem [shape: f32[1,128], index: 3, kind: input, shape index: {}]
  %s4 = inlined_call_operand.vmem [shape: f32[32,16], index: 4, kind: input, shape index: {}]
  %s5 = inlined_call_operand.vmem [shape: f32[1,16], index: 5, kind: input, shape index: {}]
  %s6 = inlined_call_operand.vmem [shape: f32[1,32], index: 6, kind: input, shape index: {}]
  %s7 = inlined_call_operand.vmem [shape: f32[1,32], index: 7, kind: input, shape index: {}]
  %s8 = inlined_call_operand.hbm [shape: f32[8,16], index: 8, kind: output, shape index: {0}]
  %s9 = inlined_call_operand.hbm [shape: f32[1,32], index: 9, kind: output, shape index: {1}]
  %s10 = inlined_call_operand.hbm [shape: f32[1,32], index: 10, kind: output, shape index: {2}]
  %11 = xla_tuple %s8, %s9, %s10
  %s12 = sld [smem:[#allocation0]]
  $region58: #{tpu_custom_call.1} parent=0
    _
  %s14 = ssub.s32 1, %s12
  %s15 = scalar_select 0, %s14, %s12
  $region1: #{tpu_custom_call.1} parent=0
    #allocation4 [shape = 'u8[4096]{0}', space=vmem, size = 0x1000, scoped, tag = 'output window, operand 0, single buffered']
    #allocation5 [shape = 's32[1]{0}', space=sflag, size = 0x4, scoped, tag = 'scoped memory for tpu_custom_call.1']
    #allocation6 [shape = 'u8[512]{0}', space=vmem, size = 0x400, scoped, tag = 'output window, operand 1, single buffered']
    #allocation7 [shape = 's32[1]{0}', space=sflag, size = 0x4, scoped, tag = 'scoped memory for tpu_custom_call.1']
    #allocation8 [shape = 'u8[512]{0}', space=vmem, size = 0x400, scoped, tag = 'output window, operand 2, single buffered']
    %16 = vsyncpa [#allocation5], 0
    %17 = vsyncpa [#allocation7], 0
    // Predicated region
    $region2: #{tpu_custom_call.1} parent=1 // pred_check
      _
    $region3: #{tpu_custom_call.1} parent=1 // pred_check_branch
      %19 = sbr.rel (0) target = $region5
    $region4: #{tpu_custom_call.1} parent=1 // pred_region
      _
    $region5: #{tpu_custom_call.1} parent=1 // pred_fallthru
      _
    // Predicated region
    $region6: #{tpu_custom_call.1} parent=1 // pred_check
      _
    $region7: #{tpu_custom_call.1} parent=1 // pred_check_branch
      %21 = sbr.rel (0) target = $region9
    $region8: #{tpu_custom_call.1} parent=1 // pred_region
      _
    $region9: #{tpu_custom_call.1} parent=1 // pred_fallthru
      _
    // Predicated region
    $region10: #{tpu_custom_call.1} parent=1 // pred_check
      _
    $region11: #{tpu_custom_call.1} parent=1 // pred_check_branch
      %23 = sbr.rel (0) target = $region13
    $region12: #{tpu_custom_call.1} parent=1 // pred_region
      _
    $region13: #{tpu_custom_call.1} parent=1 // pred_fallthru
      _
    // Predicated region
    $region14: #{tpu_custom_call.1} parent=1 // pred_check
      _
    $region15: #{tpu_custom_call.1} parent=1 // pred_check_branch
      %25 = sbr.rel (0) target = $region17
    $region16: #{tpu_custom_call.1} parent=1 // pred_region
      _
    $region17: #{tpu_custom_call.1} parent=1 // pred_fallthru
      _
    // Predicated region
    $region18: #{tpu_custom_call.1} parent=1 // pred_check
      _
    $region19: #{tpu_custom_call.1} parent=1 // pred_check_branch
      %27 = sbr.rel (0) target = $region21
    $region20: #{tpu_custom_call.1} parent=1 // pred_region
      _
    $region21: #{tpu_custom_call.1} parent=1 // pred_fallthru
      _
    // Predicated region
    $region22: #{tpu_custom_call.1} parent=1 // pred_check
      _
    $region23: #{tpu_custom_call.1} parent=1 // pred_check_branch
      %29 = sbr.rel (0) target = $region25
    $region24: #{tpu_custom_call.1} parent=1 // pred_region
      _
    $region25: #{tpu_custom_call.1} parent=1 // pred_fallthru
      _
    // Predicated region
    $region26: #{tpu_custom_call.1} parent=1 // pred_check
      _
    $region27: #{tpu_custom_call.1} parent=1 // pred_check_branch
      %31 = sbr.rel (0) target = $region29
    $region28: #{tpu_custom_call.1} parent=1 // pred_region
      _
    $region29: #{tpu_custom_call.1} parent=1 // pred_fallthru
      _
    // Predicated region
    $region30: #{tpu_custom_call.1} parent=1 // pred_check
      _
    $region31: #{tpu_custom_call.1} parent=1 // pred_check_branch
      %33 = sbr.rel (0) target = $region33
    $region32: #{tpu_custom_call.1} parent=1 // pred_region
      _
    $region33: #{tpu_custom_call.1} parent=1 // pred_fallthru
      _
    %v34 = vld [vmem:[%s2] sm:$0xff]
    %v35 = vld [vmem:[%s2 + $0x8] sm:$0xff]
    %v36 = vld [vmem:[%s2 + $0x10] sm:$0xff]
    %v37 = vld [vmem:[%s2 + $0x18] sm:$0xff]
    %v38 = vld [vmem:[%s0] sm:$0xff]
    %v39 = vld [vmem:[%s1] sm:$0xff]
    %v40 = vld [vmem:[%s3] sm:$0x1]
    %v42 = vlaneseq
    %v43 = vshrl.u32 %v42, 7
    %v44 = vsub.s32 0, %v43
    %v45 = vrot.slane %v40, %v44
    %vm47 = vcmask 64512
    %v49 = vsel %vm47, %v38, 0
    %51 = vmatprep.subr.mxu0 0.0
    %52 = vmatpush1.msra.mxu0 %v39
    %53 = vmatprep.subr.mxu0 0.0
    %54 = vmatpush1.msra.mxu0 0.0
    %55 = vmatprep.subr.mxu0 0.0
    %56 = vmatpush1.msra.mxu0 0.0
    %57 = vmatprep.subr.mxu0 0.0
    %58 = vmatpush1.msra.mxu0 0.0
    %59 = vmatprep.subr.mxu0 0.0
    %60 = vmatpush1.msra.mxu0 0.0
    %61 = vmatprep.subr.mxu0 0.0
    %62 = vmatpush1.msra.mxu0 0.0
    %63 = vmatprep.subr.mxu0 0.0
    %64 = vmatpush1.msra.mxu0 0.0
    %65 = vmatprep.subr.mxu0 0.0
    %66 = vmatpush1.msra.mxu0 0.0
    %67 = vmatprep.subr.mxu0 0.0
    %68 = vmatpush1.msra.mxu0 0.0
    %69 = vmatprep.subr.mxu0 0.0
    %70 = vmatpush1.msra.mxu0 0.0
    %71 = vmatprep.subr.mxu0 0.0
    %72 = vmatpush1.msra.mxu0 0.0
    %73 = vmatprep.subr.mxu0 0.0
    %74 = vmatpush1.msra.mxu0 0.0
    %75 = vmatprep.subr.mxu0 0.0
    %76 = vmatpush1.msra.mxu0 0.0
    %77 = vmatprep.subr.mxu0 0.0
    %78 = vmatpush1.msra.mxu0 0.0
    %79 = vmatprep.subr.mxu0 0.0
    %80 = vmatpush1.msra.mxu0 0.0
    %81 = vmatprep.subr.mxu0 0.0
    %82 = vmatpush1.msra.mxu0 0.0
    %83 = vmatprep.subr.mxu0 0.0
    %84 = vmatpush1.msra.mxu0 0.0
    %85 = vmatprep.subr.mxu0 0.0
    %86 = vmatpush1.msra.mxu0 0.0
    %87 = vmatprep.subr.mxu0 0.0
    %88 = vmatpush1.msra.mxu0 0.0
    %89 = vmatprep.subr.mxu0 0.0
    %90 = vmatpush1.msra.mxu0 0.0
    %91 = vmatprep.subr.mxu0 0.0
    %92 = vmatpush1.msra.mxu0 0.0
    %93 = vmatprep.subr.mxu0 0.0
    %94 = vmatpush1.msra.mxu0 0.0
    %95 = vmatprep.subr.mxu0 0.0
    %96 = vmatpush1.msra.mxu0 0.0
    %97 = vmatprep.subr.mxu0 0.0
    %98 = vmatpush1.msra.mxu0 0.0
    %99 = vmatprep.subr.mxu0 0.0
    %100 = vmatpush1.msra.mxu0 0.0
    %101 = vmatprep.subr.mxu0 0.0
    %102 = vmatpush1.msra.mxu0 0.0
    %103 = vmatprep.subr.mxu0 0.0
    %104 = vmatpush1.msra.mxu0 0.0
    %105 = vmatprep.subr.mxu0 0.0
    %106 = vmatpush1.msra.mxu0 0.0
    %107 = vmatprep.subr.mxu0 0.0
    %108 = vmatpush1.msra.mxu0 0.0
    %109 = vmatprep.subr.mxu0 0.0
    %110 = vmatpush1.msra.mxu0 0.0
    %111 = vmatprep.subr.mxu0 0.0
    %112 = vmatpush1.msra.mxu0 0.0
    %113 = vmatprep.subr.mxu0 0.0
    %114 = vmatpush1.msra.mxu0 0.0
    %115 = vmatprep.mubr.f32.mxu0 0.0
    %116 = vmatmul.mubr.f32.gmra.mrb[0].mxu0 %v49
    %v117 = vpop.f32.mrb[0].mxu0
    %v118 = vadd.f32 %v45, %v117
    %v119 = vpop.f32.mrb[0].mxu0
    %120 = vdwg.mxu0
    %121 = vst [vmem:[#allocation2] sm:$0xff] %v118
    %v122 = vld [vmem:[%s6] sm:$0x1]
    %v123 = vld [vmem:[%s7] sm:$0x1]
    %v124 = vld [vmem:[#allocation2] sm:$0x1]
    %vm125 = vcmask 261120
    %v127 = vsel %vm125, %v122, 0
    %129 = vmatprep.subr.mxu0 0.0
    %130 = vmatpush1.msra.mxu0 %v34
    %131 = vmatprep.subr.mxu0 0.0
    %132 = vmatpush1.msra.mxu0 %v35
    %133 = vmatprep.subr.mxu0 0.0
    %134 = vmatpush1.msra.mxu0 %v36
    %135 = vmatprep.subr.mxu0 0.0
    %136 = vmatpush1.msra.mxu0 %v37
    %137 = vmatprep.subr.mxu0 0.0
    %138 = vmatpush1.msra.mxu0 0.0
    %139 = vmatprep.subr.mxu0 0.0
    %140 = vmatpush1.msra.mxu0 0.0
    %141 = vmatprep.subr.mxu0 0.0
    %142 = vmatpush1.msra.mxu0 0.0
    %143 = vmatprep.subr.mxu0 0.0
    %144 = vmatpush1.msra.mxu0 0.0
    %145 = vmatprep.subr.mxu0 0.0
    %146 = vmatpush1.msra.mxu0 0.0
    %147 = vmatprep.subr.mxu0 0.0
    %148 = vmatpush1.msra.mxu0 0.0
    %149 = vmatprep.subr.mxu0 0.0
    %150 = vmatpush1.msra.mxu0 0.0
    %151 = vmatprep.subr.mxu0 0.0
    %152 = vmatpush1.msra.mxu0 0.0
    %153 = vmatprep.subr.mxu0 0.0
    %154 = vmatpush1.msra.mxu0 0.0
    %155 = vmatprep.subr.mxu0 0.0
    %156 = vmatpush1.msra.mxu0 0.0
    %157 = vmatprep.subr.mxu0 0.0
    %158 = vmatpush1.msra.mxu0 0.0
    %159 = vmatprep.subr.mxu0 0.0
    %160 = vmatpush1.msra.mxu0 0.0
    %161 = vmatprep.subr.mxu0 0.0
    %162 = vmatpush1.msra.mxu0 0.0
    %163 = vmatprep.subr.mxu0 0.0
    %164 = vmatpush1.msra.mxu0 0.0
    %165 = vmatprep.subr.mxu0 0.0
    %166 = vmatpush1.msra.mxu0 0.0
    %167 = vmatprep.subr.mxu0 0.0
    %168 = vmatpush1.msra.mxu0 0.0
    %169 = vmatprep.subr.mxu0 0.0
    %170 = vmatpush1.msra.mxu0 0.0
    %171 = vmatprep.subr.mxu0 0.0
    %172 = vmatpush1.msra.mxu0 0.0
    %173 = vmatprep.subr.mxu0 0.0
    %174 = vmatpush1.msra.mxu0 0.0
    %175 = vmatprep.subr.mxu0 0.0
    %176 = vmatpush1.msra.mxu0 0.0
    %177 = vmatprep.subr.mxu0 0.0
    %178 = vmatpush1.msra.mxu0 0.0
    %179 = vmatprep.subr.mxu0 0.0
    %180 = vmatpush1.msra.mxu0 0.0
    %181 = vmatprep.subr.mxu0 0.0
    %182 = vmatpush1.msra.mxu0 0.0
    %183 = vmatprep.subr.mxu0 0.0
    %184 = vmatpush1.msra.mxu0 0.0
    %185 = vmatprep.subr.mxu0 0.0
    %186 = vmatpush1.msra.mxu0 0.0
    %187 = vmatprep.subr.mxu0 0.0
    %188 = vmatpush1.msra.mxu0 0.0
    %189 = vmatprep.subr.mxu0 0.0
    %190 = vmatpush1.msra.mxu0 0.0
    %191 = vmatprep.subr.mxu0 0.0
    %192 = vmatpush1.msra.mxu0 0.0
    %193 = vmatprep.mubr.f32.mxu0 0.0
    %194 = vmatmul.mubr.f32.gmra.mrb[0].mxu0 %v127
    %v195 = vpop.f32.mrb[0].mxu0
    %v196 = vadd.f32 0.0, %v195
    %v197 = vpop.f32.mrb[0].mxu0
    %198 = vdwg.mxu0
    %v199 = vadd.f32 %v124, %v196
    %v200 = vxor.u32 %v199, 2147483648
    %v201 = vmul.f32 %v200, 1.442695
    %v202 = vpow.pop %v201
    %v203 = vadd.f32 %v202, 1.0
    %v204 = vrcp.pop %v203
    %v205 = vmul.f32 1.0, %v204
    %v206 = vtanh.pop %v199
    %v208 = vlaneseq
    %v209 = vshrl.u32 %v208, 7
    %v210 = vsub.s32 0, %v209
    %v211 = vrot.slane %v123, %v210
    %212 = vrot.lane.b32.xlu0 %v211, 32
    %v213 = vpop.permute.xlu0 %212
    %v215 = vmul.f32 %v205, %v213
    %217 = vrot.lane.b32.xlu0 %v206, 64
    %v218 = vpop.permute.xlu0 %217
    %v220 = vmul.f32 %v205, %v218
    %222 = vrot.lane.b32.xlu0 %v220, 32
    %v223 = vpop.permute.xlu0 %222
    %v225 = vadd.f32 %v215, %v223
    %v226 = vtanh.pop %v225
    %228 = vrot.lane.b32.xlu0 %v226, 64
    %v229 = vpop.permute.xlu0 %228
    %v231 = vmul.f32 %v205, %v229
    %233 = vrot.lane.b32.xlu0 %v231, 32
    %v234 = vpop.permute.xlu0 %233
    %vm236 = vcmask 253952
    %237 = vst.msk [vmem:[#allocation3] sm:$0x1] %vm236, %v234
    %v238 = vld [vmem:[#allocation2 + $0x1] sm:$0x1]
    %v239 = vsel %vm125, %v234, 0
    %241 = vmatprep.subr.mxu0 0.0
    %242 = vmatpush1.msra.mxu0 %v34
    %243 = vmatprep.subr.mxu0 0.0
    %244 = vmatpush1.msra.mxu0 %v35
    %245 = vmatprep.subr.mxu0 0.0
    %246 = vmatpush1.msra.mxu0 %v36
    %247 = vmatprep.subr.mxu0 0.0
    %248 = vmatpush1.msra.mxu0 %v37
    %249 = vmatprep.subr.mxu0 0.0
    %250 = vmatpush1.msra.mxu0 0.0
    %251 = vmatprep.subr.mxu0 0.0
    %252 = vmatpush1.msra.mxu0 0.0
    %253 = vmatprep.subr.mxu0 0.0
    %254 = vmatpush1.msra.mxu0 0.0
    %255 = vmatprep.subr.mxu0 0.0
    %256 = vmatpush1.msra.mxu0 0.0
    %257 = vmatprep.subr.mxu0 0.0
    %258 = vmatpush1.msra.mxu0 0.0
    %259 = vmatprep.subr.mxu0 0.0
    %260 = vmatpush1.msra.mxu0 0.0
    %261 = vmatprep.subr.mxu0 0.0
    %262 = vmatpush1.msra.mxu0 0.0
    %263 = vmatprep.subr.mxu0 0.0
    %264 = vmatpush1.msra.mxu0 0.0
    %265 = vmatprep.subr.mxu0 0.0
    %266 = vmatpush1.msra.mxu0 0.0
    %267 = vmatprep.subr.mxu0 0.0
    %268 = vmatpush1.msra.mxu0 0.0
    %269 = vmatprep.subr.mxu0 0.0
    %270 = vmatpush1.msra.mxu0 0.0
    %271 = vmatprep.subr.mxu0 0.0
    %272 = vmatpush1.msra.mxu0 0.0
    %273 = vmatprep.subr.mxu0 0.0
    %274 = vmatpush1.msra.mxu0 0.0
    %275 = vmatprep.subr.mxu0 0.0
    %276 = vmatpush1.msra.mxu0 0.0
    %277 = vmatprep.subr.mxu0 0.0
    %278 = vmatpush1.msra.mxu0 0.0
    %279 = vmatprep.subr.mxu0 0.0
    %280 = vmatpush1.msra.mxu0 0.0
    %281 = vmatprep.subr.mxu0 0.0
    %282 = vmatpush1.msra.mxu0 0.0
    %283 = vmatprep.subr.mxu0 0.0
    %284 = vmatpush1.msra.mxu0 0.0
    %285 = vmatprep.subr.mxu0 0.0
    %286 = vmatpush1.msra.mxu0 0.0
    %287 = vmatprep.subr.mxu0 0.0
    %288 = vmatpush1.msra.mxu0 0.0
    %289 = vmatprep.subr.mxu0 0.0
    %290 = vmatpush1.msra.mxu0 0.0
    %291 = vmatprep.subr.mxu0 0.0
    %292 = vmatpush1.msra.mxu0 0.0
    %293 = vmatprep.subr.mxu0 0.0
    %294 = vmatpush1.msra.mxu0 0.0
    %295 = vmatprep.subr.mxu0 0.0
    %296 = vmatpush1.msra.mxu0 0.0
    %297 = vmatprep.subr.mxu0 0.0
    %298 = vmatpush1.msra.mxu0 0.0
    %299 = vmatprep.subr.mxu0 0.0
    %300 = vmatpush1.msra.mxu0 0.0
    %301 = vmatprep.subr.mxu0 0.0
    %302 = vmatpush1.msra.mxu0 0.0
    %303 = vmatprep.subr.mxu0 0.0
    %304 = vmatpush1.msra.mxu0 0.0
    %305 = vmatprep.mubr.f32.mxu0 0.0
    %306 = vmatmul.mubr.f32.gmra.mrb[0].mxu0 %v239
    %v307 = vpop.f32.mrb[0].mxu0
    %v308 = vadd.f32 0.0, %v307
    %v309 = vpop.f32.mrb[0].mxu0
    %310 = vdwg.mxu0
    %v311 = vadd.f32 %v238, %v308
    %v312 = vxor.u32 %v311, 2147483648
    %v313 = vmul.f32 %v312, 1.442695
    %v314 = vpow.pop %v313
    %v315 = vadd.f32 %v314, 1.0
    %v316 = vrcp.pop %v315
    %v317 = vmul.f32 1.0, %v316
    %v318 = vtanh.pop %v311
    %v319 = vmul.f32 %v317, %v225
    %321 = vrot.lane.b32.xlu0 %v318, 64
    %v322 = vpop.permute.xlu0 %321
    %v324 = vmul.f32 %v317, %v322
    %326 = vrot.lane.b32.xlu0 %v324, 32
    %v327 = vpop.permute.xlu0 %326
    %v329 = vadd.f32 %v319, %v327
    %v330 = vtanh.pop %v329
    %332 = vrot.lane.b32.xlu0 %v330, 64
    %v333 = vpop.permute.xlu0 %332
    %v335 = vmul.f32 %v317, %v333
    %337 = vrot.lane.b32.xlu0 %v335, 32
    %v338 = vpop.permute.xlu0 %337
    %340 = vst.msk [vmem:[#allocation3 + $0x1] sm:$0x1] %vm236, %v338
    %v341 = vld [vmem:[#allocation2 + $0x2] sm:$0x1]
    %v342 = vsel %vm125, %v338, 0
    %344 = vmatprep.subr.mxu0 0.0
    %345 = vmatpush1.msra.mxu0 %v34
    %346 = vmatprep.subr.mxu0 0.0
    %347 = vmatpush1.msra.mxu0 %v35
    %348 = vmatprep.subr.mxu0 0.0
    %349 = vmatpush1.msra.mxu0 %v36
    %350 = vmatprep.subr.mxu0 0.0
    %351 = vmatpush1.msra.mxu0 %v37
    %352 = vmatprep.subr.mxu0 0.0
    %353 = vmatpush1.msra.mxu0 0.0
    %354 = vmatprep.subr.mxu0 0.0
    %355 = vmatpush1.msra.mxu0 0.0
    %356 = vmatprep.subr.mxu0 0.0
    %357 = vmatpush1.msra.mxu0 0.0
    %358 = vmatprep.subr.mxu0 0.0
    %359 = vmatpush1.msra.mxu0 0.0
    %360 = vmatprep.subr.mxu0 0.0
    %361 = vmatpush1.msra.mxu0 0.0
    %362 = vmatprep.subr.mxu0 0.0
    %363 = vmatpush1.msra.mxu0 0.0
    %364 = vmatprep.subr.mxu0 0.0
    %365 = vmatpush1.msra.mxu0 0.0
    %366 = vmatprep.subr.mxu0 0.0
    %367 = vmatpush1.msra.mxu0 0.0
    %368 = vmatprep.subr.mxu0 0.0
    %369 = vmatpush1.msra.mxu0 0.0
    %370 = vmatprep.subr.mxu0 0.0
    %371 = vmatpush1.msra.mxu0 0.0
    %372 = vmatprep.subr.mxu0 0.0
    %373 = vmatpush1.msra.mxu0 0.0
    %374 = vmatprep.subr.mxu0 0.0
    %375 = vmatpush1.msra.mxu0 0.0
    %376 = vmatprep.subr.mxu0 0.0
    %377 = vmatpush1.msra.mxu0 0.0
    %378 = vmatprep.subr.mxu0 0.0
    %379 = vmatpush1.msra.mxu0 0.0
    %380 = vmatprep.subr.mxu0 0.0
    %381 = vmatpush1.msra.mxu0 0.0
    %382 = vmatprep.subr.mxu0 0.0
    %383 = vmatpush1.msra.mxu0 0.0
    %384 = vmatprep.subr.mxu0 0.0
    %385 = vmatpush1.msra.mxu0 0.0
    %386 = vmatprep.subr.mxu0 0.0
    %387 = vmatpush1.msra.mxu0 0.0
    %388 = vmatprep.subr.mxu0 0.0
    %389 = vmatpush1.msra.mxu0 0.0
    %390 = vmatprep.subr.mxu0 0.0
    %391 = vmatpush1.msra.mxu0 0.0
    %392 = vmatprep.subr.mxu0 0.0
    %393 = vmatpush1.msra.mxu0 0.0
    %394 = vmatprep.subr.mxu0 0.0
    %395 = vmatpush1.msra.mxu0 0.0
    %396 = vmatprep.subr.mxu0 0.0
    %397 = vmatpush1.msra.mxu0 0.0
    %398 = vmatprep.subr.mxu0 0.0
    %399 = vmatpush1.msra.mxu0 0.0
    %400 = vmatprep.subr.mxu0 0.0
    %401 = vmatpush1.msra.mxu0 0.0
    %402 = vmatprep.subr.mxu0 0.0
    %403 = vmatpush1.msra.mxu0 0.0
    %404 = vmatprep.subr.mxu0 0.0
    %405 = vmatpush1.msra.mxu0 0.0
    %406 = vmatprep.subr.mxu0 0.0
    %407 = vmatpush1.msra.mxu0 0.0
    %408 = vmatprep.mubr.f32.mxu0 0.0
    %409 = vmatmul.mubr.f32.gmra.mrb[0].mxu0 %v342
    %v410 = vpop.f32.mrb[0].mxu0
    %v411 = vadd.f32 0.0, %v410
    %v412 = vpop.f32.mrb[0].mxu0
    %413 = vdwg.mxu0
    %v414 = vadd.f32 %v341, %v411
    %v415 = vxor.u32 %v414, 2147483648
    %v416 = vmul.f32 %v415, 1.442695
    %v417 = vpow.pop %v416
    %v418 = vadd.f32 %v417, 1.0
    %v419 = vrcp.pop %v418
    %v420 = vmul.f32 1.0, %v419
    %v421 = vtanh.pop %v414
    %v422 = vmul.f32 %v420, %v329
    %424 = vrot.lane.b32.xlu0 %v421, 64
    %v425 = vpop.permute.xlu0 %424
    %v427 = vmul.f32 %v420, %v425
    %429 = vrot.lane.b32.xlu0 %v427, 32
    %v430 = vpop.permute.xlu0 %429
    %v432 = vadd.f32 %v422, %v430
    %v433 = vtanh.pop %v432
    %435 = vrot.lane.b32.xlu0 %v433, 64
    %v436 = vpop.permute.xlu0 %435
    %v438 = vmul.f32 %v420, %v436
    %440 = vrot.lane.b32.xlu0 %v438, 32
    %v441 = vpop.permute.xlu0 %440
    %443 = vst.msk [vmem:[#allocation3 + $0x2] sm:$0x1] %vm236, %v441
    %v444 = vld [vmem:[#allocation2 + $0x3] sm:$0x1]
    %v445 = vsel %vm125, %v441, 0
    %447 = vmatprep.subr.mxu0 0.0
    %448 = vmatpush1.msra.mxu0 %v34
    %449 = vmatprep.subr.mxu0 0.0
    %450 = vmatpush1.msra.mxu0 %v35
    %451 = vmatprep.subr.mxu0 0.0
    %452 = vmatpush1.msra.mxu0 %v36
    %453 = vmatprep.subr.mxu0 0.0
    %454 = vmatpush1.msra.mxu0 %v37
    %455 = vmatprep.subr.mxu0 0.0
    %456 = vmatpush1.msra.mxu0 0.0
    %457 = vmatprep.subr.mxu0 0.0
    %458 = vmatpush1.msra.mxu0 0.0
    %459 = vmatprep.subr.mxu0 0.0
    %460 = vmatpush1.msra.mxu0 0.0
    %461 = vmatprep.subr.mxu0 0.0
    %462 = vmatpush1.msra.mxu0 0.0
    %463 = vmatprep.subr.mxu0 0.0
    %464 = vmatpush1.msra.mxu0 0.0
    %465 = vmatprep.subr.mxu0 0.0
    %466 = vmatpush1.msra.mxu0 0.0
    %467 = vmatprep.subr.mxu0 0.0
    %468 = vmatpush1.msra.mxu0 0.0
    %469 = vmatprep.subr.mxu0 0.0
    %470 = vmatpush1.msra.mxu0 0.0
    %471 = vmatprep.subr.mxu0 0.0
    %472 = vmatpush1.msra.mxu0 0.0
    %473 = vmatprep.subr.mxu0 0.0
    %474 = vmatpush1.msra.mxu0 0.0
    %475 = vmatprep.subr.mxu0 0.0
    %476 = vmatpush1.msra.mxu0 0.0
    %477 = vmatprep.subr.mxu0 0.0
    %478 = vmatpush1.msra.mxu0 0.0
    %479 = vmatprep.subr.mxu0 0.0
    %480 = vmatpush1.msra.mxu0 0.0
    %481 = vmatprep.subr.mxu0 0.0
    %482 = vmatpush1.msra.mxu0 0.0
    %483 = vmatprep.subr.mxu0 0.0
    %484 = vmatpush1.msra.mxu0 0.0
    %485 = vmatprep.subr.mxu0 0.0
    %486 = vmatpush1.msra.mxu0 0.0
    %487 = vmatprep.subr.mxu0 0.0
    %488 = vmatpush1.msra.mxu0 0.0
    %489 = vmatprep.subr.mxu0 0.0
    %490 = vmatpush1.msra.mxu0 0.0
    %491 = vmatprep.subr.mxu0 0.0
    %492 = vmatpush1.msra.mxu0 0.0
    %493 = vmatprep.subr.mxu0 0.0
    %494 = vmatpush1.msra.mxu0 0.0
    %495 = vmatprep.subr.mxu0 0.0
    %496 = vmatpush1.msra.mxu0 0.0
    %497 = vmatprep.subr.mxu0 0.0
    %498 = vmatpush1.msra.mxu0 0.0
    %499 = vmatprep.subr.mxu0 0.0
    %500 = vmatpush1.msra.mxu0 0.0
    %501 = vmatprep.subr.mxu0 0.0
    %502 = vmatpush1.msra.mxu0 0.0
    %503 = vmatprep.subr.mxu0 0.0
    %504 = vmatpush1.msra.mxu0 0.0
    %505 = vmatprep.subr.mxu0 0.0
    %506 = vmatpush1.msra.mxu0 0.0
    %507 = vmatprep.subr.mxu0 0.0
    %508 = vmatpush1.msra.mxu0 0.0
    %509 = vmatprep.subr.mxu0 0.0
    %510 = vmatpush1.msra.mxu0 0.0
    %511 = vmatprep.mubr.f32.mxu0 0.0
    %512 = vmatmul.mubr.f32.gmra.mrb[0].mxu0 %v445
    %v513 = vpop.f32.mrb[0].mxu0
    %v514 = vadd.f32 0.0, %v513
    %v515 = vpop.f32.mrb[0].mxu0
    %516 = vdwg.mxu0
    %v517 = vadd.f32 %v444, %v514
    %v518 = vxor.u32 %v517, 2147483648
    %v519 = vmul.f32 %v518, 1.442695
    %v520 = vpow.pop %v519
    %v521 = vadd.f32 %v520, 1.0
    %v522 = vrcp.pop %v521
    %v523 = vmul.f32 1.0, %v522
    %v524 = vtanh.pop %v517
    %v525 = vmul.f32 %v523, %v432
    %527 = vrot.lane.b32.xlu0 %v524, 64
    %v528 = vpop.permute.xlu0 %527
    %v530 = vmul.f32 %v523, %v528
    %532 = vrot.lane.b32.xlu0 %v530, 32
    %v533 = vpop.permute.xlu0 %532
    %v535 = vadd.f32 %v525, %v533
    %v536 = vtanh.pop %v535
    %538 = vrot.lane.b32.xlu0 %v536, 64
    %v539 = vpop.permute.xlu0 %538
    %v541 = vmul.f32 %v523, %v539
    %543 = vrot.lane.b32.xlu0 %v541, 32
    %v544 = vpop.permute.xlu0 %543
    %546 = vst.msk [vmem:[#allocation3 + $0x3] sm:$0x1] %vm236, %v544
    %v547 = vld [vmem:[#allocation2 + $0x4] sm:$0x1]
    %v548 = vsel %vm125, %v544, 0
    %550 = vmatprep.subr.mxu0 0.0
    %551 = vmatpush1.msra.mxu0 %v34
    %552 = vmatprep.subr.mxu0 0.0
    %553 = vmatpush1.msra.mxu0 %v35
    %554 = vmatprep.subr.mxu0 0.0
    %555 = vmatpush1.msra.mxu0 %v36
    %556 = vmatprep.subr.mxu0 0.0
    %557 = vmatpush1.msra.mxu0 %v37
    %558 = vmatprep.subr.mxu0 0.0
    %559 = vmatpush1.msra.mxu0 0.0
    %560 = vmatprep.subr.mxu0 0.0
    %561 = vmatpush1.msra.mxu0 0.0
    %562 = vmatprep.subr.mxu0 0.0
    %563 = vmatpush1.msra.mxu0 0.0
    %564 = vmatprep.subr.mxu0 0.0
    %565 = vmatpush1.msra.mxu0 0.0
    %566 = vmatprep.subr.mxu0 0.0
    %567 = vmatpush1.msra.mxu0 0.0
    %568 = vmatprep.subr.mxu0 0.0
    %569 = vmatpush1.msra.mxu0 0.0
    %570 = vmatprep.subr.mxu0 0.0
    %571 = vmatpush1.msra.mxu0 0.0
    %572 = vmatprep.subr.mxu0 0.0
    %573 = vmatpush1.msra.mxu0 0.0
    %574 = vmatprep.subr.mxu0 0.0
    %575 = vmatpush1.msra.mxu0 0.0
    %576 = vmatprep.subr.mxu0 0.0
    %577 = vmatpush1.msra.mxu0 0.0
    %578 = vmatprep.subr.mxu0 0.0
    %579 = vmatpush1.msra.mxu0 0.0
    %580 = vmatprep.subr.mxu0 0.0
    %581 = vmatpush1.msra.mxu0 0.0
    %582 = vmatprep.subr.mxu0 0.0
    %583 = vmatpush1.msra.mxu0 0.0
    %584 = vmatprep.subr.mxu0 0.0
    %585 = vmatpush1.msra.mxu0 0.0
    %586 = vmatprep.subr.mxu0 0.0
    %587 = vmatpush1.msra.mxu0 0.0
    %588 = vmatprep.subr.mxu0 0.0
    %589 = vmatpush1.msra.mxu0 0.0
    %590 = vmatprep.subr.mxu0 0.0
    %591 = vmatpush1.msra.mxu0 0.0
    %592 = vmatprep.subr.mxu0 0.0
    %593 = vmatpush1.msra.mxu0 0.0
    %594 = vmatprep.subr.mxu0 0.0
    %595 = vmatpush1.msra.mxu0 0.0
    %596 = vmatprep.subr.mxu0 0.0
    %597 = vmatpush1.msra.mxu0 0.0
    %598 = vmatprep.subr.mxu0 0.0
    %599 = vmatpush1.msra.mxu0 0.0
    %600 = vmatprep.subr.mxu0 0.0
    %601 = vmatpush1.msra.mxu0 0.0
    %602 = vmatprep.subr.mxu0 0.0
    %603 = vmatpush1.msra.mxu0 0.0
    %604 = vmatprep.subr.mxu0 0.0
    %605 = vmatpush1.msra.mxu0 0.0
    %606 = vmatprep.subr.mxu0 0.0
    %607 = vmatpush1.msra.mxu0 0.0
    %608 = vmatprep.subr.mxu0 0.0
    %609 = vmatpush1.msra.mxu0 0.0
    %610 = vmatprep.subr.mxu0 0.0
    %611 = vmatpush1.msra.mxu0 0.0
    %612 = vmatprep.subr.mxu0 0.0
    %613 = vmatpush1.msra.mxu0 0.0
    %614 = vmatprep.mubr.f32.mxu0 0.0
    %615 = vmatmul.mubr.f32.gmra.mrb[0].mxu0 %v548
    %v616 = vpop.f32.mrb[0].mxu0
    %v617 = vadd.f32 0.0, %v616
    %v618 = vpop.f32.mrb[0].mxu0
    %619 = vdwg.mxu0
    %v620 = vadd.f32 %v547, %v617
    %v621 = vxor.u32 %v620, 2147483648
    %v622 = vmul.f32 %v621, 1.442695
    %v623 = vpow.pop %v622
    %v624 = vadd.f32 %v623, 1.0
    %v625 = vrcp.pop %v624
    %v626 = vmul.f32 1.0, %v625
    %v627 = vtanh.pop %v620
    %v628 = vmul.f32 %v626, %v535
    %630 = vrot.lane.b32.xlu0 %v627, 64
    %v631 = vpop.permute.xlu0 %630
    %v633 = vmul.f32 %v626, %v631
    %635 = vrot.lane.b32.xlu0 %v633, 32
    %v636 = vpop.permute.xlu0 %635
    %v638 = vadd.f32 %v628, %v636
    %v639 = vtanh.pop %v638
    %641 = vrot.lane.b32.xlu0 %v639, 64
    %v642 = vpop.permute.xlu0 %641
    %v644 = vmul.f32 %v626, %v642
    %646 = vrot.lane.b32.xlu0 %v644, 32
    %v647 = vpop.permute.xlu0 %646
    %649 = vst.msk [vmem:[#allocation3 + $0x4] sm:$0x1] %vm236, %v647
    %v650 = vld [vmem:[#allocation2 + $0x5] sm:$0x1]
    %v651 = vsel %vm125, %v647, 0
    %653 = vmatprep.subr.mxu0 0.0
    %654 = vmatpush1.msra.mxu0 %v34
    %655 = vmatprep.subr.mxu0 0.0
    %656 = vmatpush1.msra.mxu0 %v35
    %657 = vmatprep.subr.mxu0 0.0
    %658 = vmatpush1.msra.mxu0 %v36
    %659 = vmatprep.subr.mxu0 0.0
    %660 = vmatpush1.msra.mxu0 %v37
    %661 = vmatprep.subr.mxu0 0.0
    %662 = vmatpush1.msra.mxu0 0.0
    %663 = vmatprep.subr.mxu0 0.0
    %664 = vmatpush1.msra.mxu0 0.0
    %665 = vmatprep.subr.mxu0 0.0
    %666 = vmatpush1.msra.mxu0 0.0
    %667 = vmatprep.subr.mxu0 0.0
    %668 = vmatpush1.msra.mxu0 0.0
    %669 = vmatprep.subr.mxu0 0.0
    %670 = vmatpush1.msra.mxu0 0.0
    %671 = vmatprep.subr.mxu0 0.0
    %672 = vmatpush1.msra.mxu0 0.0
    %673 = vmatprep.subr.mxu0 0.0
    %674 = vmatpush1.msra.mxu0 0.0
    %675 = vmatprep.subr.mxu0 0.0
    %676 = vmatpush1.msra.mxu0 0.0
    %677 = vmatprep.subr.mxu0 0.0
    %678 = vmatpush1.msra.mxu0 0.0
    %679 = vmatprep.subr.mxu0 0.0
    %680 = vmatpush1.msra.mxu0 0.0
    %681 = vmatprep.subr.mxu0 0.0
    %682 = vmatpush1.msra.mxu0 0.0
    %683 = vmatprep.subr.mxu0 0.0
    %684 = vmatpush1.msra.mxu0 0.0
    %685 = vmatprep.subr.mxu0 0.0
    %686 = vmatpush1.msra.mxu0 0.0
    %687 = vmatprep.subr.mxu0 0.0
    %688 = vmatpush1.msra.mxu0 0.0
    %689 = vmatprep.subr.mxu0 0.0
    %690 = vmatpush1.msra.mxu0 0.0
    %691 = vmatprep.subr.mxu0 0.0
    %692 = vmatpush1.msra.mxu0 0.0
    %693 = vmatprep.subr.mxu0 0.0
    %694 = vmatpush1.msra.mxu0 0.0
    %695 = vmatprep.subr.mxu0 0.0
    %696 = vmatpush1.msra.mxu0 0.0
    %697 = vmatprep.subr.mxu0 0.0
    %698 = vmatpush1.msra.mxu0 0.0
    %699 = vmatprep.subr.mxu0 0.0
    %700 = vmatpush1.msra.mxu0 0.0
    %701 = vmatprep.subr.mxu0 0.0
    %702 = vmatpush1.msra.mxu0 0.0
    %703 = vmatprep.subr.mxu0 0.0
    %704 = vmatpush1.msra.mxu0 0.0
    %705 = vmatprep.subr.mxu0 0.0
    %706 = vmatpush1.msra.mxu0 0.0
    %707 = vmatprep.subr.mxu0 0.0
    %708 = vmatpush1.msra.mxu0 0.0
    %709 = vmatprep.subr.mxu0 0.0
    %710 = vmatpush1.msra.mxu0 0.0
    %711 = vmatprep.subr.mxu0 0.0
    %712 = vmatpush1.msra.mxu0 0.0
    %713 = vmatprep.subr.mxu0 0.0
    %714 = vmatpush1.msra.mxu0 0.0
    %715 = vmatprep.subr.mxu0 0.0
    %716 = vmatpush1.msra.mxu0 0.0
    %717 = vmatprep.mubr.f32.mxu0 0.0
    %718 = vmatmul.mubr.f32.gmra.mrb[0].mxu0 %v651
    %v719 = vpop.f32.mrb[0].mxu0
    %v720 = vadd.f32 0.0, %v719
    %v721 = vpop.f32.mrb[0].mxu0
    %722 = vdwg.mxu0
    %v723 = vadd.f32 %v650, %v720
    %v724 = vxor.u32 %v723, 2147483648
    %v725 = vmul.f32 %v724, 1.442695
    %v726 = vpow.pop %v725
    %v727 = vadd.f32 %v726, 1.0
    %v728 = vrcp.pop %v727
    %v729 = vmul.f32 1.0, %v728
    %v730 = vtanh.pop %v723
    %v731 = vmul.f32 %v729, %v638
    %733 = vrot.lane.b32.xlu0 %v730, 64
    %v734 = vpop.permute.xlu0 %733
    %v736 = vmul.f32 %v729, %v734
    %738 = vrot.lane.b32.xlu0 %v736, 32
    %v739 = vpop.permute.xlu0 %738
    %v741 = vadd.f32 %v731, %v739
    %v742 = vtanh.pop %v741
    %744 = vrot.lane.b32.xlu0 %v742, 64
    %v745 = vpop.permute.xlu0 %744
    %v747 = vmul.f32 %v729, %v745
    %749 = vrot.lane.b32.xlu0 %v747, 32
    %v750 = vpop.permute.xlu0 %749
    %752 = vst.msk [vmem:[#allocation3 + $0x5] sm:$0x1] %vm236, %v750
    %v753 = vld [vmem:[#allocation2 + $0x6] sm:$0x1]
    %v754 = vsel %vm125, %v750, 0
    %756 = vmatprep.subr.mxu0 0.0
    %757 = vmatpush1.msra.mxu0 %v34
    %758 = vmatprep.subr.mxu0 0.0
    %759 = vmatpush1.msra.mxu0 %v35
    %760 = vmatprep.subr.mxu0 0.0
    %761 = vmatpush1.msra.mxu0 %v36
    %762 = vmatprep.subr.mxu0 0.0
    %763 = vmatpush1.msra.mxu0 %v37
    %764 = vmatprep.subr.mxu0 0.0
    %765 = vmatpush1.msra.mxu0 0.0
    %766 = vmatprep.subr.mxu0 0.0
    %767 = vmatpush1.msra.mxu0 0.0
    %768 = vmatprep.subr.mxu0 0.0
    %769 = vmatpush1.msra.mxu0 0.0
    %770 = vmatprep.subr.mxu0 0.0
    %771 = vmatpush1.msra.mxu0 0.0
    %772 = vmatprep.subr.mxu0 0.0
    %773 = vmatpush1.msra.mxu0 0.0
    %774 = vmatprep.subr.mxu0 0.0
    %775 = vmatpush1.msra.mxu0 0.0
    %776 = vmatprep.subr.mxu0 0.0
    %777 = vmatpush1.msra.mxu0 0.0
    %778 = vmatprep.subr.mxu0 0.0
    %779 = vmatpush1.msra.mxu0 0.0
    %780 = vmatprep.subr.mxu0 0.0
    %781 = vmatpush1.msra.mxu0 0.0
    %782 = vmatprep.subr.mxu0 0.0
    %783 = vmatpush1.msra.mxu0 0.0
    %784 = vmatprep.subr.mxu0 0.0
    %785 = vmatpush1.msra.mxu0 0.0
    %786 = vmatprep.subr.mxu0 0.0
    %787 = vmatpush1.msra.mxu0 0.0
    %788 = vmatprep.subr.mxu0 0.0
    %789 = vmatpush1.msra.mxu0 0.0
    %790 = vmatprep.subr.mxu0 0.0
    %791 = vmatpush1.msra.mxu0 0.0
    %792 = vmatprep.subr.mxu0 0.0
    %793 = vmatpush1.msra.mxu0 0.0
    %794 = vmatprep.subr.mxu0 0.0
    %795 = vmatpush1.msra.mxu0 0.0
    %796 = vmatprep.subr.mxu0 0.0
    %797 = vmatpush1.msra.mxu0 0.0
    %798 = vmatprep.subr.mxu0 0.0
    %799 = vmatpush1.msra.mxu0 0.0
    %800 = vmatprep.subr.mxu0 0.0
    %801 = vmatpush1.msra.mxu0 0.0
    %802 = vmatprep.subr.mxu0 0.0
    %803 = vmatpush1.msra.mxu0 0.0
    %804 = vmatprep.subr.mxu0 0.0
    %805 = vmatpush1.msra.mxu0 0.0
    %806 = vmatprep.subr.mxu0 0.0
    %807 = vmatpush1.msra.mxu0 0.0
    %808 = vmatprep.subr.mxu0 0.0
    %809 = vmatpush1.msra.mxu0 0.0
    %810 = vmatprep.subr.mxu0 0.0
    %811 = vmatpush1.msra.mxu0 0.0
    %812 = vmatprep.subr.mxu0 0.0
    %813 = vmatpush1.msra.mxu0 0.0
    %814 = vmatprep.subr.mxu0 0.0
    %815 = vmatpush1.msra.mxu0 0.0
    %816 = vmatprep.subr.mxu0 0.0
    %817 = vmatpush1.msra.mxu0 0.0
    %818 = vmatprep.subr.mxu0 0.0
    %819 = vmatpush1.msra.mxu0 0.0
    %820 = vmatprep.mubr.f32.mxu0 0.0
    %821 = vmatmul.mubr.f32.gmra.mrb[0].mxu0 %v754
    %v822 = vpop.f32.mrb[0].mxu0
    %v823 = vadd.f32 0.0, %v822
    %v824 = vpop.f32.mrb[0].mxu0
    %825 = vdwg.mxu0
    %v826 = vadd.f32 %v753, %v823
    %v827 = vxor.u32 %v826, 2147483648
    %v828 = vmul.f32 %v827, 1.442695
    %v829 = vpow.pop %v828
    %v830 = vadd.f32 %v829, 1.0
    %v831 = vrcp.pop %v830
    %v832 = vmul.f32 1.0, %v831
    %v833 = vtanh.pop %v826
    %v834 = vmul.f32 %v832, %v741
    %836 = vrot.lane.b32.xlu0 %v833, 64
    %v837 = vpop.permute.xlu0 %836
    %v839 = vmul.f32 %v832, %v837
    %841 = vrot.lane.b32.xlu0 %v839, 32
    %v842 = vpop.permute.xlu0 %841
    %v844 = vadd.f32 %v834, %v842
    %v845 = vtanh.pop %v844
    %847 = vrot.lane.b32.xlu0 %v845, 64
    %v848 = vpop.permute.xlu0 %847
    %v850 = vmul.f32 %v832, %v848
    %852 = vrot.lane.b32.xlu0 %v850, 32
    %v853 = vpop.permute.xlu0 %852
    %855 = vst.msk [vmem:[#allocation3 + $0x6] sm:$0x1] %vm236, %v853
    %v856 = vld [vmem:[#allocation2 + $0x7] sm:$0x1]
    %v857 = vsel %vm125, %v853, 0
    %859 = vmatprep.subr.mxu0 0.0
    %860 = vmatpush1.msra.mxu0 %v34
    %861 = vmatprep.subr.mxu0 0.0
    %862 = vmatpush1.msra.mxu0 %v35
    %863 = vmatprep.subr.mxu0 0.0
    %864 = vmatpush1.msra.mxu0 %v36
    %865 = vmatprep.subr.mxu0 0.0
    %866 = vmatpush1.msra.mxu0 %v37
    %867 = vmatprep.subr.mxu0 0.0
    %868 = vmatpush1.msra.mxu0 0.0
    %869 = vmatprep.subr.mxu0 0.0
    %870 = vmatpush1.msra.mxu0 0.0
    %871 = vmatprep.subr.mxu0 0.0
    %872 = vmatpush1.msra.mxu0 0.0
    %873 = vmatprep.subr.mxu0 0.0
    %874 = vmatpush1.msra.mxu0 0.0
    %875 = vmatprep.subr.mxu0 0.0
    %876 = vmatpush1.msra.mxu0 0.0
    %877 = vmatprep.subr.mxu0 0.0
    %878 = vmatpush1.msra.mxu0 0.0
    %879 = vmatprep.subr.mxu0 0.0
    %880 = vmatpush1.msra.mxu0 0.0
    %881 = vmatprep.subr.mxu0 0.0
    %882 = vmatpush1.msra.mxu0 0.0
    %883 = vmatprep.subr.mxu0 0.0
    %884 = vmatpush1.msra.mxu0 0.0
    %885 = vmatprep.subr.mxu0 0.0
    %886 = vmatpush1.msra.mxu0 0.0
    %887 = vmatprep.subr.mxu0 0.0
    %888 = vmatpush1.msra.mxu0 0.0
    %889 = vmatprep.subr.mxu0 0.0
    %890 = vmatpush1.msra.mxu0 0.0
    %891 = vmatprep.subr.mxu0 0.0
    %892 = vmatpush1.msra.mxu0 0.0
    %893 = vmatprep.subr.mxu0 0.0
    %894 = vmatpush1.msra.mxu0 0.0
    %895 = vmatprep.subr.mxu0 0.0
    %896 = vmatpush1.msra.mxu0 0.0
    %897 = vmatprep.subr.mxu0 0.0
    %898 = vmatpush1.msra.mxu0 0.0
    %899 = vmatprep.subr.mxu0 0.0
    %900 = vmatpush1.msra.mxu0 0.0
    %901 = vmatprep.subr.mxu0 0.0
    %902 = vmatpush1.msra.mxu0 0.0
    %903 = vmatprep.subr.mxu0 0.0
    %904 = vmatpush1.msra.mxu0 0.0
    %905 = vmatprep.subr.mxu0 0.0
    %906 = vmatpush1.msra.mxu0 0.0
    %907 = vmatprep.subr.mxu0 0.0
    %908 = vmatpush1.msra.mxu0 0.0
    %909 = vmatprep.subr.mxu0 0.0
    %910 = vmatpush1.msra.mxu0 0.0
    %911 = vmatprep.subr.mxu0 0.0
    %912 = vmatpush1.msra.mxu0 0.0
    %913 = vmatprep.subr.mxu0 0.0
    %914 = vmatpush1.msra.mxu0 0.0
    %915 = vmatprep.subr.mxu0 0.0
    %916 = vmatpush1.msra.mxu0 0.0
    %917 = vmatprep.subr.mxu0 0.0
    %918 = vmatpush1.msra.mxu0 0.0
    %919 = vmatprep.subr.mxu0 0.0
    %920 = vmatpush1.msra.mxu0 0.0
    %921 = vmatprep.subr.mxu0 0.0
    %922 = vmatpush1.msra.mxu0 0.0
    %923 = vmatprep.mubr.f32.mxu0 0.0
    %924 = vmatmul.mubr.f32.gmra.mrb[0].mxu0 %v857
    %v925 = vpop.f32.mrb[0].mxu0
    %v926 = vadd.f32 0.0, %v925
    %v927 = vpop.f32.mrb[0].mxu0
    %928 = vdwg.mxu0
    %v929 = vadd.f32 %v856, %v926
    %v930 = vxor.u32 %v929, 2147483648
    %v931 = vmul.f32 %v930, 1.442695
    %v932 = vpow.pop %v931
    %v933 = vadd.f32 %v932, 1.0
    %v934 = vrcp.pop %v933
    %v935 = vmul.f32 1.0, %v934
    %v936 = vtanh.pop %v929
    %v937 = vmul.f32 %v935, %v844
    %939 = vrot.lane.b32.xlu0 %v936, 64
    %v940 = vpop.permute.xlu0 %939
    %v942 = vmul.f32 %v935, %v940
    %944 = vrot.lane.b32.xlu0 %v942, 32
    %v945 = vpop.permute.xlu0 %944
    %v947 = vadd.f32 %v937, %v945
    %v948 = vtanh.pop %v947
    %950 = vrot.lane.b32.xlu0 %v948, 64
    %v951 = vpop.permute.xlu0 %950
    %v953 = vmul.f32 %v935, %v951
    %955 = vrot.lane.b32.xlu0 %v953, 32
    %v956 = vpop.permute.xlu0 %955
    %958 = vst.msk [vmem:[#allocation3 + $0x7] sm:$0x1] %vm236, %v956
    %959 = vst.msk [vmem:[#allocation6] sm:$0x1] %vm236, %v956
    %961 = vrot.lane.b32.xlu0 %v947, 96
    %v962 = vpop.permute.xlu0 %961
    %964 = vst.msk [vmem:[#allocation8] sm:$0x1] %vm236, %v962
    %v965 = vld [vmem:[#allocation3] sm:$0xff]
    %v966 = vld [vmem:[%s4] sm:$0xff]
    %v967 = vld [vmem:[%s4 + $0x8] sm:$0xff]
    %v968 = vld [vmem:[%s4 + $0x10] sm:$0xff]
    %v969 = vld [vmem:[%s4 + $0x18] sm:$0xff]
    %v970 = vld [vmem:[%s5] sm:$0x1]
    %v972 = vlaneseq
    %v973 = vshrl.u32 %v972, 7
    %v974 = vsub.s32 0, %v973
    %v975 = vrot.slane %v970, %v974
    %v978 = vsel %vm125, %v965, 0
    %980 = vmatprep.subr.mxu0 0.0
    %981 = vmatpush1.msra.mxu0 %v966
    %982 = vmatprep.subr.mxu0 0.0
    %983 = vmatpush1.msra.mxu0 %v967
    %984 = vmatprep.subr.mxu0 0.0
    %985 = vmatpush1.msra.mxu0 %v968
    %986 = vmatprep.subr.mxu0 0.0
    %987 = vmatpush1.msra.mxu0 %v969
    %988 = vmatprep.subr.mxu0 0.0
    %989 = vmatpush1.msra.mxu0 0.0
    %990 = vmatprep.subr.mxu0 0.0
    %991 = vmatpush1.msra.mxu0 0.0
    %992 = vmatprep.subr.mxu0 0.0
    %993 = vmatpush1.msra.mxu0 0.0
    %994 = vmatprep.subr.mxu0 0.0
    %995 = vmatpush1.msra.mxu0 0.0
    %996 = vmatprep.subr.mxu0 0.0
    %997 = vmatpush1.msra.mxu0 0.0
    %998 = vmatprep.subr.mxu0 0.0
    %999 = vmatpush1.msra.mxu0 0.0
    %1000 = vmatprep.subr.mxu0 0.0
    %1001 = vmatpush1.msra.mxu0 0.0
    %1002 = vmatprep.subr.mxu0 0.0
    %1003 = vmatpush1.msra.mxu0 0.0
    %1004 = vmatprep.subr.mxu0 0.0
    %1005 = vmatpush1.msra.mxu0 0.0
    %1006 = vmatprep.subr.mxu0 0.0
    %1007 = vmatpush1.msra.mxu0 0.0
    %1008 = vmatprep.subr.mxu0 0.0
    %1009 = vmatpush1.msra.mxu0 0.0
    %1010 = vmatprep.subr.mxu0 0.0
    %1011 = vmatpush1.msra.mxu0 0.0
    %1012 = vmatprep.subr.mxu0 0.0
    %1013 = vmatpush1.msra.mxu0 0.0
    %1014 = vmatprep.subr.mxu0 0.0
    %1015 = vmatpush1.msra.mxu0 0.0
    %1016 = vmatprep.subr.mxu0 0.0
    %1017 = vmatpush1.msra.mxu0 0.0
    %1018 = vmatprep.subr.mxu0 0.0
    %1019 = vmatpush1.msra.mxu0 0.0
    %1020 = vmatprep.subr.mxu0 0.0
    %1021 = vmatpush1.msra.mxu0 0.0
    %1022 = vmatprep.subr.mxu0 0.0
    %1023 = vmatpush1.msra.mxu0 0.0
    %1024 = vmatprep.subr.mxu0 0.0
    %1025 = vmatpush1.msra.mxu0 0.0
    %1026 = vmatprep.subr.mxu0 0.0
    %1027 = vmatpush1.msra.mxu0 0.0
    %1028 = vmatprep.subr.mxu0 0.0
    %1029 = vmatpush1.msra.mxu0 0.0
    %1030 = vmatprep.subr.mxu0 0.0
    %1031 = vmatpush1.msra.mxu0 0.0
    %1032 = vmatprep.subr.mxu0 0.0
    %1033 = vmatpush1.msra.mxu0 0.0
    %1034 = vmatprep.subr.mxu0 0.0
    %1035 = vmatpush1.msra.mxu0 0.0
    %1036 = vmatprep.subr.mxu0 0.0
    %1037 = vmatpush1.msra.mxu0 0.0
    %1038 = vmatprep.subr.mxu0 0.0
    %1039 = vmatpush1.msra.mxu0 0.0
    %1040 = vmatprep.subr.mxu0 0.0
    %1041 = vmatpush1.msra.mxu0 0.0
    %1042 = vmatprep.subr.mxu0 0.0
    %1043 = vmatpush1.msra.mxu0 0.0
    %1044 = vmatprep.mubr.f32.mxu0 0.0
    %1045 = vmatmul.mubr.f32.gmra.mrb[0].mxu0 %v978
    %v1046 = vpop.f32.mrb[0].mxu0
    %v1047 = vadd.f32 %v975, %v1046
    %v1048 = vpop.f32.mrb[0].mxu0
    %1049 = vdwg.mxu0
    %vm1050 = vcmask 130048
    %v1051 = vsel %vm1050, %v1047, -inf
    %1052 = vmax.xlane.f32.xlu0 %v1051
    %v1053 = vpop.xlane.xlu0 %1052
    %v1054 = vsub.f32 %v1047, %v1053
    %v1055 = vmul.f32 %v1054, 1.442695
    %v1056 = vpow.pop %v1055
    %v1057 = vsel %vm1050, %v1056, 0.0
    %1058 = vadd.xlane.f32.xlu0 %v1057
    %v1059 = vpop.xlane.xlu0 %1058
    %v1060 = vlog2.pop %v1059
    %v1061 = vmul.f32 %v1060, 0.6931472
    %v1062 = vadd.f32 %v1061, %v1053
    %v1063 = vsub.f32 %v1047, %v1062
    %1064 = vst.msk [vmem:[#allocation4] sm:$0xff] %vm1050, %v1063
    // Predicated region
    $region34: #{tpu_custom_call.1} parent=1 // pred_check
      _
    $region35: #{tpu_custom_call.1} parent=1 // pred_check_branch
      %1066 = sbr.rel (0) target = $region37
    $region36: #{tpu_custom_call.1} parent=1 // pred_region
      %s1068 = ssub.s32 128, 128
      %1069 = vsyncadd [#allocation5], %s1068
      %s1071 = sshll.u32 [#allocation4], 4
      %s1072 = int_to_ptr.vmem [resolvable:$true] %s1071
      %1074 = dma.vmem_to_hbm [thread:$0]  %s1072, 128, %s8, [#allocation5]
    $region37: #{tpu_custom_call.1} parent=1 // pred_fallthru
      _
    // Predicated region
    $region38: #{tpu_custom_call.1} parent=1 // pred_check
      _
    $region39: #{tpu_custom_call.1} parent=1 // pred_check_branch
      %1076 = sbr.rel (0) target = $region41
    $region40: #{tpu_custom_call.1} parent=1 // pred_region
      %s1078 = ssub.s32 16, 16
      %1079 = vsyncadd [#allocation7], %s1078
      %s1081 = sshll.u32 [#allocation6], 4
      %s1082 = int_to_ptr.vmem [resolvable:$true] %s1081
      %1084 = dma.vmem_to_hbm [thread:$0]  %s1082, 16, %s9, [#allocation7]
    $region41: #{tpu_custom_call.1} parent=1 // pred_fallthru
      _
    // Predicated region
    $region42: #{tpu_custom_call.1} parent=1 // pred_check
      _
    $region43: #{tpu_custom_call.1} parent=1 // pred_check_branch
      %1086 = sbr.rel (0) target = $region45
    $region44: #{tpu_custom_call.1} parent=1 // pred_region
      %s1088 = ssub.s32 16, 16
      %1089 = vsyncadd [#allocation7], %s1088
      %s1091 = sshll.u32 [#allocation8], 4
      %s1092 = int_to_ptr.vmem [resolvable:$true] %s1091
      %1094 = dma.vmem_to_hbm [thread:$0]  %s1092, 16, %s10, [#allocation7]
    $region45: #{tpu_custom_call.1} parent=1 // pred_fallthru
      _
    // Predicated region
    $region46: #{tpu_custom_call.1} parent=1 // pred_check
      _
    $region47: #{tpu_custom_call.1} parent=1 // pred_check_branch
      %1096 = sbr.rel (0) target = $region49
    $region48: #{tpu_custom_call.1} parent=1 // pred_region
      %1097 = dma.done [#allocation5], 128
    $region49: #{tpu_custom_call.1} parent=1 // pred_fallthru
      _
    // Predicated region
    $region50: #{tpu_custom_call.1} parent=1 // pred_check
      _
    $region51: #{tpu_custom_call.1} parent=1 // pred_check_branch
      %1099 = sbr.rel (0) target = $region53
    $region52: #{tpu_custom_call.1} parent=1 // pred_region
      %1100 = dma.done [#allocation7], 16
    $region53: #{tpu_custom_call.1} parent=1 // pred_fallthru
      _
    // Predicated region
    $region54: #{tpu_custom_call.1} parent=1 // pred_check
      _
    $region55: #{tpu_custom_call.1} parent=1 // pred_check_branch
      %1102 = sbr.rel (0) target = $region57
    $region56: #{tpu_custom_call.1} parent=1 // pred_region
      %1103 = dma.done [#allocation7], 16
    $region57: #{tpu_custom_call.1} parent=1 // pred_fallthru
      _
    %1104 = vsyncpa [#allocation5], 1
    %1105 = vsyncpa [#allocation7], 1

</llo_original>
